<compile_context>
chip_gen: v7x
topology: tpu7x:2x2x1
jax: 0.10.0
libtpu: 0.0.40
codegen_flags: <defaults>
</compile_context>

<pallas_src>
import functools

import jax
import jax.numpy as jnp
from jax import lax
from jax.experimental import pallas as pl
from jax.experimental.pallas import tpu as pltpu


def _mha_group_kernel(q_ref, k_ref, v_ref, pb_ref,
                      wq_ref, wkT_ref, wv_ref, wo_ref, bo_ref,
                      o_ref, *, hpg, d_k):
    # q/k/v_ref : (L, D)          bf16 activations for the current batch element
    # pb_ref    : (hpg, L, L)     bf16 positional bias for this batch element / head group
    # wq_ref    : (D, hpg*d_k)    bf16 packed Q weights (softmax scale folded in)
    # wkT_ref   : (hpg*d_k, D)    bf16 packed K weights, pre-transposed
    # wv_ref    : (D, hpg*d_k)    bf16 packed V weights
    # wo_ref    : (hpg*d_k, D)    bf16 rows of the output projection owned by this head group
    # bo_ref    : (1, D)          f32 output bias
    # o_ref     : (L, D)          f32 output block, revisited/accumulated across head groups
    g = pl.program_id(1)

    # Packed projections: contraction/N dims are hpg*d_k wide -> much better MXU fill than d_k.
    qh = jnp.dot(q_ref[...], wq_ref[...], preferred_element_type=jnp.float32)    # (L, gd)
    # K projection produced pre-transposed: (gd, D) x (L, D) contracting D -> (gd, L), so each
    # per-head score matmul below is a plain (L, d_k) @ (d_k, L) with no activation transpose.
    khT = lax.dot_general(wkT_ref[...], k_ref[...],
                          (((1,), (1,)), ((), ())),
                          preferred_element_type=jnp.float32)                    # (gd, L)
    vh = jnp.dot(v_ref[...], wv_ref[...], preferred_element_type=jnp.float32)    # (L, gd)

    qh_b = qh.astype(jnp.bfloat16)
    khT_b = khT.astype(jnp.bfloat16)
    vh_b = vh.astype(jnp.bfloat16)

    # Per packed head: scores + f32 softmax with deferred normalization.
    oh_parts = []
    for i in range(hpg):                       # statically unrolled sub-loop over packed heads
        lo = i * d_k
        hi = lo + d_k
        att = jnp.dot(qh_b[:, lo:hi], khT_b[lo:hi, :],
                      preferred_element_type=jnp.float32)                        # (L, L) f32
        att = att + pb_ref[i].astype(jnp.float32)        # bias add in f32 (bias shipped bf16)
        m = jnp.max(att, axis=-1, keepdims=True)
        e = jnp.exp(att - m)                             # f32 exp (portable to v5e's EUP)
        s = jnp.sum(e, axis=-1, keepdims=True)
        # Deferred normalization: scale the (L, d_k) PV result instead of the (L, L) probs.
        ohi = jnp.dot(e.astype(jnp.bfloat16), vh_b[:, lo:hi],
                      preferred_element_type=jnp.float32)                        # (L, d_k)
        ohi = ohi * pl.reciprocal(s, approx=True)
        oh_parts.append(ohi.astype(jnp.bfloat16))

    oh = jnp.concatenate(oh_parts, axis=-1)                                      # (L, gd) bf16
    # Packed output-projection contribution of this head group: (L, gd) @ (gd, D).
    contrib = jnp.dot(oh, wo_ref[...], preferred_element_type=jnp.float32)       # (L, D) f32

    @pl.when(g == 0)
    def _():
        o_ref[...] = contrib + bo_ref[...]

    @pl.when(g > 0)
    def _():
        o_ref[...] = o_ref[...] + contrib


def _heads_per_group(heads, d_k, target_width=256):
    """Largest divisor of `heads` such that hpg * d_k <= target_width (MXU fill)."""
    hpg = 1
    for cand in range(1, heads + 1):
        if heads % cand == 0 and cand * d_k <= target_width:
            hpg = cand
    return hpg


def multihead_attention_pallas(query, key, value, posbias, params, heads):
    """query/key/value: (B, L, d_model); posbias: (B, heads, L, L)."""
    B, L, D = query.shape
    wq, wk, wv, wo, bo = params
    assert D % heads == 0, "d_model must be divisible by heads"
    d_k = D // heads
    scale = float(d_k) ** (-0.5)   # (d_k^-0.25 on q) * (d_k^-0.25 on k), folded into Wq

    hpg = _heads_per_group(heads, d_k)   # heads packed per grid step
    n_groups = heads // hpg
    gd = hpg * d_k

    cdt = jnp.bfloat16
    q_in = query.astype(cdt)
    k_in = key.astype(cdt)
    v_in = value.astype(cdt)
    # posbias is the dominant HBM stream at realistic L: ship it bf16, add in f32 in-kernel.
    pb_in = posbias.astype(cdt)

    # Grouped, head-major weight layouts built once at trace time (outside the kernel).
    wq4 = (wq * scale).reshape(D, n_groups, gd).transpose(1, 0, 2).astype(cdt)   # (G, D, gd)
    wkT4 = wk.reshape(D, n_groups, gd).transpose(1, 2, 0).astype(cdt)            # (G, gd, D)
    wv4 = wv.reshape(D, n_groups, gd).transpose(1, 0, 2).astype(cdt)             # (G, D, gd)
    wo4 = wo.reshape(n_groups, gd, D).astype(cdt)                                # (G, gd, D)
    bo2 = bo.reshape(1, D).astype(jnp.float32)

    kernel = functools.partial(_mha_group_kernel, hpg=hpg, d_k=d_k)

    return pl.pallas_call(
        kernel,
        out_shape=jax.ShapeDtypeStruct((B, L, D), jnp.float32),
        grid_spec=pltpu.PrefetchScalarGridSpec(
            num_scalar_prefetch=0,
            grid=(B, n_groups),
            in_specs=[
                pl.BlockSpec((None, L, D), lambda b, g: (b, 0, 0)),            # query  (bf16)
                pl.BlockSpec((None, L, D), lambda b, g: (b, 0, 0)),            # key    (bf16)
                pl.BlockSpec((None, L, D), lambda b, g: (b, 0, 0)),            # value  (bf16)
                pl.BlockSpec((None, hpg, L, L), lambda b, g: (b, g, 0, 0)),    # posbias (bf16)
                pl.BlockSpec((None, D, gd), lambda b, g: (g, 0, 0)),           # Wq group
                pl.BlockSpec((None, gd, D), lambda b, g: (g, 0, 0)),           # Wk^T group
                pl.BlockSpec((None, D, gd), lambda b, g: (g, 0, 0)),           # Wv group
                pl.BlockSpec((None, gd, D), lambda b, g: (g, 0, 0)),           # Wo group
                pl.BlockSpec((1, D), lambda b, g: (0, 0)),                     # bo
            ],
            out_specs=pl.BlockSpec((None, L, D), lambda b, g: (b, 0, 0)),
        ),
        compiler_params=pltpu.CompilerParams(
            dimension_semantics=("parallel", "arbitrary"),
            vmem_limit_bytes=48 * 1024 * 1024,   # safe on v7x's 64 MiB; raise on v5e/v6e if needed
        ),
    )(q_in, k_in, v_in, pb_in, wq4, wkT4, wv4, wo4, bo2)


def multihead_attention_ref(query, key, value, posbias, params, heads):
    """Pure-JAX fp32 reference mirroring the PyTorch forward."""
    wq, wk, wv, wo, bo = params
    B, L, D = query.shape
    d_k = D // heads
    scaling = float(d_k) ** (-0.25)
    q = (query @ wq).reshape(B, L, heads, d_k).transpose(0, 2, 1, 3) * scaling
    k = (key @ wk).reshape(B, L, heads, d_k).transpose(0, 2, 3, 1) * scaling
    v = (value @ wv).reshape(B, L, heads, d_k).transpose(0, 2, 1, 3)
    att = jnp.einsum('bhik,bhkj->bhij', q, k) + posbias
    att = jax.nn.softmax(att, axis=-1)
    out = jnp.einsum('bhij,bhjd->bhid', att, v)
    out = out.transpose(0, 2, 1, 3).reshape(B, L, D)
    return out @ wo + bo


if __name__ == "__main__":
    # Small deterministic example.
    B, L, d_model, heads = 2, 8, 32, 4

    key0 = jax.random.PRNGKey(0)
    ks = jax.random.split(key0, 9)
    query = jax.random.normal(ks[0], (B, L, d_model), dtype=jnp.float32)
    key_in = jax.random.normal(ks[1], (B, L, d_model), dtype=jnp.float32)
    value = jax.random.normal(ks[2], (B, L, d_model), dtype=jnp.float32)
    posbias = 0.1 * jax.random.normal(ks[3], (B, heads, L, L), dtype=jnp.float32)

    # Deterministic parameter init (shapes match nn.Linear(d_model, d_model)).
    scale = 1.0 / (d_model ** 0.5)
    wq = scale * jax.random.normal(ks[4], (d_model, d_model), dtype=jnp.float32)
    wk = scale * jax.random.normal(ks[5], (d_model, d_model), dtype=jnp.float32)
    wv = scale * jax.random.normal(ks[6], (d_model, d_model), dtype=jnp.float32)
    wo = scale * jax.random.normal(ks[7], (d_model, d_model), dtype=jnp.float32)
    bo = 0.01 * jax.random.normal(ks[8], (d_model,), dtype=jnp.float32)
    params = (wq, wk, wv, wo, bo)

    out = multihead_attention_pallas(query, key_in, value, posbias, params, heads)
    out = jax.block_until_ready(out)

    ref = multihead_attention_ref(query, key_in, value, posbias, params, heads)
    # bf16 MXU operands + bf16 bias + approx reciprocal => looser tolerance than fp32-only.
    assert jnp.allclose(out, ref, atol=5e-2, rtol=5e-2), "mismatch vs reference"

    print("KERNEL_OK")
</pallas_src>

<mosaic_0001>
module attributes {stable_mosaic.version = 11 : i64} {
  func.func @_mha_group_kernel(%arg0: i32, %arg1: i32, %arg2: memref<1x8x32xbf16, #tpu.memory_space<vmem>>, %arg3: memref<1x8x32xbf16, #tpu.memory_space<vmem>>, %arg4: memref<1x8x32xbf16, #tpu.memory_space<vmem>>, %arg5: memref<1x4x8x8xbf16, #tpu.memory_space<vmem>>, %arg6: memref<1x32x32xbf16, #tpu.memory_space<vmem>>, %arg7: memref<1x32x32xbf16, #tpu.memory_space<vmem>>, %arg8: memref<1x32x32xbf16, #tpu.memory_space<vmem>>, %arg9: memref<1x32x32xbf16, #tpu.memory_space<vmem>>, %arg10: memref<1x32xf32, #tpu.memory_space<vmem>>, %arg11: memref<1x8x32xf32, #tpu.memory_space<vmem>>) attributes {dimension_semantics = [#tpu.dimension_semantics<parallel>, #tpu.dimension_semantics<arbitrary>], iteration_bounds = array<i64: 2, 1>, scalar_prefetch = 0 : i64, scratch_operands = 0 : i64, tpu.core_type = #tpu.core_type<tc>, window_params = [{transform_indices = @transform_0, window_bounds = array<i64: 1, 8, 32>}, {transform_indices = @transform_1, window_bounds = array<i64: 1, 8, 32>}, {transform_indices = @transform_2, window_bounds = array<i64: 1, 8, 32>}, {transform_indices = @transform_3, window_bounds = array<i64: 1, 4, 8, 8>}, {transform_indices = @transform_4, window_bounds = array<i64: 1, 32, 32>}, {transform_indices = @transform_5, window_bounds = array<i64: 1, 32, 32>}, {transform_indices = @transform_6, window_bounds = array<i64: 1, 32, 32>}, {transform_indices = @transform_7, window_bounds = array<i64: 1, 32, 32>}, {pipeline_mode = #tpu.pipeline_mode<synchronous>, transform_indices = @transform_8, window_bounds = array<i64: 1, 32>}, {transform_indices = @transform_9, window_bounds = array<i64: 1, 8, 32>}]} {
    %c0 = arith.constant 0 : index
    %c0_0 = arith.constant 0 : index
    %c0_1 = arith.constant 0 : index
    %0 = vector.load %arg2[%c0, %c0_0, %c0_1] : memref<1x8x32xbf16, #tpu.memory_space<vmem>>, vector<1x8x32xbf16>
    %1 = vector.shape_cast %0 : vector<1x8x32xbf16> to vector<8x32xbf16>
    %c0_2 = arith.constant 0 : index
    %c0_3 = arith.constant 0 : index
    %c0_4 = arith.constant 0 : index
    %2 = vector.load %arg6[%c0_2, %c0_3, %c0_4] : memref<1x32x32xbf16, #tpu.memory_space<vmem>>, vector<1x32x32xbf16>
    %3 = vector.shape_cast %2 : vector<1x32x32xbf16> to vector<32x32xbf16>
    %cst = arith.constant dense<0.000000e+00> : vector<8x32xf32>
    %4 = tpu.matmul %1, %3, %cst {dimension_numbers = #tpu.dot_dimension_numbers<[1], [0], [0], [1], [0, 0, 1, 1], [], []>} : vector<8x32xbf16>, vector<32x32xbf16>, vector<8x32xf32> -> vector<8x32xf32>
    %c0_5 = arith.constant 0 : index
    %c0_6 = arith.constant 0 : index
    %c0_7 = arith.constant 0 : index
    %5 = vector.load %arg7[%c0_5, %c0_6, %c0_7] : memref<1x32x32xbf16, #tpu.memory_space<vmem>>, vector<1x32x32xbf16>
    %6 = vector.shape_cast %5 : vector<1x32x32xbf16> to vector<32x32xbf16>
    %c0_8 = arith.constant 0 : index
    %c0_9 = arith.constant 0 : index
    %c0_10 = arith.constant 0 : index
    %7 = vector.load %arg3[%c0_8, %c0_9, %c0_10] : memref<1x8x32xbf16, #tpu.memory_space<vmem>>, vector<1x8x32xbf16>
    %8 = vector.shape_cast %7 : vector<1x8x32xbf16> to vector<8x32xbf16>
    %cst_11 = arith.constant dense<0.000000e+00> : vector<32x8xf32>
    %9 = tpu.matmul %6, %8, %cst_11 {dimension_numbers = #tpu.dot_dimension_numbers<[1], [1], [0], [0], [0, 0, 1, 0], [], []>} : vector<32x32xbf16>, vector<8x32xbf16>, vector<32x8xf32> -> vector<32x8xf32>
    %c0_12 = arith.constant 0 : index
    %c0_13 = arith.constant 0 : index
    %c0_14 = arith.constant 0 : index
    %10 = vector.load %arg4[%c0_12, %c0_13, %c0_14] : memref<1x8x32xbf16, #tpu.memory_space<vmem>>, vector<1x8x32xbf16>
    %11 = vector.shape_cast %10 : vector<1x8x32xbf16> to vector<8x32xbf16>
    %c0_15 = arith.constant 0 : index
    %c0_16 = arith.constant 0 : index
    %c0_17 = arith.constant 0 : index
    %12 = vector.load %arg8[%c0_15, %c0_16, %c0_17] : memref<1x32x32xbf16, #tpu.memory_space<vmem>>, vector<1x32x32xbf16>
    %13 = vector.shape_cast %12 : vector<1x32x32xbf16> to vector<32x32xbf16>
    %cst_18 = arith.constant dense<0.000000e+00> : vector<8x32xf32>
    %14 = tpu.matmul %11, %13, %cst_18 {dimension_numbers = #tpu.dot_dimension_numbers<[1], [0], [0], [1], [0, 0, 1, 1], [], []>} : vector<8x32xbf16>, vector<32x32xbf16>, vector<8x32xf32> -> vector<8x32xf32>
    %15 = arith.truncf %4 : vector<8x32xf32> to vector<8x32xbf16>
    %16 = arith.truncf %9 : vector<32x8xf32> to vector<32x8xbf16>
    %17 = arith.truncf %14 : vector<8x32xf32> to vector<8x32xbf16>
    %18 = vector.extract_strided_slice %15 {offsets = [0, 0], sizes = [8, 8], strides = [1, 1]} : vector<8x32xbf16> to vector<8x8xbf16>
    %19 = vector.extract_strided_slice %16 {offsets = [0, 0], sizes = [8, 8], strides = [1, 1]} : vector<32x8xbf16> to vector<8x8xbf16>
    %cst_19 = arith.constant dense<0.000000e+00> : vector<8x8xf32>
    %20 = tpu.matmul %18, %19, %cst_19 {dimension_numbers = #tpu.dot_dimension_numbers<[1], [0], [0], [1], [0, 0, 1, 1], [], []>} : vector<8x8xbf16>, vector<8x8xbf16>, vector<8x8xf32> -> vector<8x8xf32>
    %c0_20 = arith.constant 0 : index
    %c0_21 = arith.constant 0 : index
    %c0_22 = arith.constant 0 : index
    %c0_23 = arith.constant 0 : index
    %21 = vector.load %arg5[%c0_20, %c0_21, %c0_22, %c0_23] : memref<1x4x8x8xbf16, #tpu.memory_space<vmem>>, vector<1x1x8x8xbf16>
    %22 = vector.shape_cast %21 : vector<1x1x8x8xbf16> to vector<8x8xbf16>
    %23 = arith.extf %22 : vector<8x8xbf16> to vector<8x8xf32>
    %24 = arith.addf %20, %23 : vector<8x8xf32>
    %cst_24 = arith.constant dense<0xFF800000> : vector<8xf32>
    %25 = vector.multi_reduction <maximumf>, %24, %cst_24 [1] : vector<8x8xf32> to vector<8xf32>
    %26 = vector.shape_cast %25 : vector<8xf32> to vector<8x1xf32>
    %27 = vector.broadcast %26 : vector<8x1xf32> to vector<8x8xf32>
    %28 = arith.subf %24, %27 : vector<8x8xf32>
    %29 = math.exp %28 : vector<8x8xf32>
    %cst_25 = arith.constant dense<0.000000e+00> : vector<8xf32>
    %30 = vector.multi_reduction <add>, %29, %cst_25 [1] : vector<8x8xf32> to vector<8xf32>
    %31 = vector.shape_cast %30 : vector<8xf32> to vector<8x1xf32>
    %32 = arith.truncf %29 : vector<8x8xf32> to vector<8x8xbf16>
    %33 = vector.extract_strided_slice %17 {offsets = [0, 0], sizes = [8, 8], strides = [1, 1]} : vector<8x32xbf16> to vector<8x8xbf16>
    %cst_26 = arith.constant dense<0.000000e+00> : vector<8x8xf32>
    %34 = tpu.matmul %32, %33, %cst_26 {dimension_numbers = #tpu.dot_dimension_numbers<[1], [0], [0], [1], [0, 0, 1, 1], [], []>} : vector<8x8xbf16>, vector<8x8xbf16>, vector<8x8xf32> -> vector<8x8xf32>
    %35 = tpu.reciprocal %31 {approx = true} : vector<8x1xf32> -> vector<8x1xf32>
    %36 = vector.broadcast %35 : vector<8x1xf32> to vector<8x8xf32>
    %37 = arith.mulf %34, %36 : vector<8x8xf32>
    %38 = arith.truncf %37 : vector<8x8xf32> to vector<8x8xbf16>
    %39 = vector.extract_strided_slice %15 {offsets = [0, 8], sizes = [8, 8], strides = [1, 1]} : vector<8x32xbf16> to vector<8x8xbf16>
    %40 = vector.extract_strided_slice %16 {offsets = [8, 0], sizes = [8, 8], strides = [1, 1]} : vector<32x8xbf16> to vector<8x8xbf16>
    %cst_27 = arith.constant dense<0.000000e+00> : vector<8x8xf32>
    %41 = tpu.matmul %39, %40, %cst_27 {dimension_numbers = #tpu.dot_dimension_numbers<[1], [0], [0], [1], [0, 0, 1, 1], [], []>} : vector<8x8xbf16>, vector<8x8xbf16>, vector<8x8xf32> -> vector<8x8xf32>
    %c0_28 = arith.constant 0 : index
    %c1 = arith.constant 1 : index
    %c0_29 = arith.constant 0 : index
    %c0_30 = arith.constant 0 : index
    %42 = vector.load %arg5[%c0_28, %c1, %c0_29, %c0_30] : memref<1x4x8x8xbf16, #tpu.memory_space<vmem>>, vector<1x1x8x8xbf16>
    %43 = vector.shape_cast %42 : vector<1x1x8x8xbf16> to vector<8x8xbf16>
    %44 = arith.extf %43 : vector<8x8xbf16> to vector<8x8xf32>
    %45 = arith.addf %41, %44 : vector<8x8xf32>
    %cst_31 = arith.constant dense<0xFF800000> : vector<8xf32>
    %46 = vector.multi_reduction <maximumf>, %45, %cst_31 [1] : vector<8x8xf32> to vector<8xf32>
    %47 = vector.shape_cast %46 : vector<8xf32> to vector<8x1xf32>
    %48 = vector.broadcast %47 : vector<8x1xf32> to vector<8x8xf32>
    %49 = arith.subf %45, %48 : vector<8x8xf32>
    %50 = math.exp %49 : vector<8x8xf32>
    %cst_32 = arith.constant dense<0.000000e+00> : vector<8xf32>
    %51 = vector.multi_reduction <add>, %50, %cst_32 [1] : vector<8x8xf32> to vector<8xf32>
    %52 = vector.shape_cast %51 : vector<8xf32> to vector<8x1xf32>
    %53 = arith.truncf %50 : vector<8x8xf32> to vector<8x8xbf16>
    %54 = vector.extract_strided_slice %17 {offsets = [0, 8], sizes = [8, 8], strides = [1, 1]} : vector<8x32xbf16> to vector<8x8xbf16>
    %cst_33 = arith.constant dense<0.000000e+00> : vector<8x8xf32>
    %55 = tpu.matmul %53, %54, %cst_33 {dimension_numbers = #tpu.dot_dimension_numbers<[1], [0], [0], [1], [0, 0, 1, 1], [], []>} : vector<8x8xbf16>, vector<8x8xbf16>, vector<8x8xf32> -> vector<8x8xf32>
    %56 = tpu.reciprocal %52 {approx = true} : vector<8x1xf32> -> vector<8x1xf32>
    %57 = vector.broadcast %56 : vector<8x1xf32> to vector<8x8xf32>
    %58 = arith.mulf %55, %57 : vector<8x8xf32>
    %59 = arith.truncf %58 : vector<8x8xf32> to vector<8x8xbf16>
    %60 = vector.extract_strided_slice %15 {offsets = [0, 16], sizes = [8, 8], strides = [1, 1]} : vector<8x32xbf16> to vector<8x8xbf16>
    %61 = vector.extract_strided_slice %16 {offsets = [16, 0], sizes = [8, 8], strides = [1, 1]} : vector<32x8xbf16> to vector<8x8xbf16>
    %cst_34 = arith.constant dense<0.000000e+00> : vector<8x8xf32>
    %62 = tpu.matmul %60, %61, %cst_34 {dimension_numbers = #tpu.dot_dimension_numbers<[1], [0], [0], [1], [0, 0, 1, 1], [], []>} : vector<8x8xbf16>, vector<8x8xbf16>, vector<8x8xf32> -> vector<8x8xf32>
    %c0_35 = arith.constant 0 : index
    %c2 = arith.constant 2 : index
    %c0_36 = arith.constant 0 : index
    %c0_37 = arith.constant 0 : index
    %63 = vector.load %arg5[%c0_35, %c2, %c0_36, %c0_37] : memref<1x4x8x8xbf16, #tpu.memory_space<vmem>>, vector<1x1x8x8xbf16>
    %64 = vector.shape_cast %63 : vector<1x1x8x8xbf16> to vector<8x8xbf16>
    %65 = arith.extf %64 : vector<8x8xbf16> to vector<8x8xf32>
    %66 = arith.addf %62, %65 : vector<8x8xf32>
    %cst_38 = arith.constant dense<0xFF800000> : vector<8xf32>
    %67 = vector.multi_reduction <maximumf>, %66, %cst_38 [1] : vector<8x8xf32> to vector<8xf32>
    %68 = vector.shape_cast %67 : vector<8xf32> to vector<8x1xf32>
    %69 = vector.broadcast %68 : vector<8x1xf32> to vector<8x8xf32>
    %70 = arith.subf %66, %69 : vector<8x8xf32>
    %71 = math.exp %70 : vector<8x8xf32>
    %cst_39 = arith.constant dense<0.000000e+00> : vector<8xf32>
    %72 = vector.multi_reduction <add>, %71, %cst_39 [1] : vector<8x8xf32> to vector<8xf32>
    %73 = vector.shape_cast %72 : vector<8xf32> to vector<8x1xf32>
    %74 = arith.truncf %71 : vector<8x8xf32> to vector<8x8xbf16>
    %75 = vector.extract_strided_slice %17 {offsets = [0, 16], sizes = [8, 8], strides = [1, 1]} : vector<8x32xbf16> to vector<8x8xbf16>
    %cst_40 = arith.constant dense<0.000000e+00> : vector<8x8xf32>
    %76 = tpu.matmul %74, %75, %cst_40 {dimension_numbers = #tpu.dot_dimension_numbers<[1], [0], [0], [1], [0, 0, 1, 1], [], []>} : vector<8x8xbf16>, vector<8x8xbf16>, vector<8x8xf32> -> vector<8x8xf32>
    %77 = tpu.reciprocal %73 {approx = true} : vector<8x1xf32> -> vector<8x1xf32>
    %78 = vector.broadcast %77 : vector<8x1xf32> to vector<8x8xf32>
    %79 = arith.mulf %76, %78 : vector<8x8xf32>
    %80 = arith.truncf %79 : vector<8x8xf32> to vector<8x8xbf16>
    %81 = vector.extract_strided_slice %15 {offsets = [0, 24], sizes = [8, 8], strides = [1, 1]} : vector<8x32xbf16> to vector<8x8xbf16>
    %82 = vector.extract_strided_slice %16 {offsets = [24, 0], sizes = [8, 8], strides = [1, 1]} : vector<32x8xbf16> to vector<8x8xbf16>
    %cst_41 = arith.constant dense<0.000000e+00> : vector<8x8xf32>
    %83 = tpu.matmul %81, %82, %cst_41 {dimension_numbers = #tpu.dot_dimension_numbers<[1], [0], [0], [1], [0, 0, 1, 1], [], []>} : vector<8x8xbf16>, vector<8x8xbf16>, vector<8x8xf32> -> vector<8x8xf32>
    %c0_42 = arith.constant 0 : index
    %c3 = arith.constant 3 : index
    %c0_43 = arith.constant 0 : index
    %c0_44 = arith.constant 0 : index
    %84 = vector.load %arg5[%c0_42, %c3, %c0_43, %c0_44] : memref<1x4x8x8xbf16, #tpu.memory_space<vmem>>, vector<1x1x8x8xbf16>
    %85 = vector.shape_cast %84 : vector<1x1x8x8xbf16> to vector<8x8xbf16>
    %86 = arith.extf %85 : vector<8x8xbf16> to vector<8x8xf32>
    %87 = arith.addf %83, %86 : vector<8x8xf32>
    %cst_45 = arith.constant dense<0xFF800000> : vector<8xf32>
    %88 = vector.multi_reduction <maximumf>, %87, %cst_45 [1] : vector<8x8xf32> to vector<8xf32>
    %89 = vector.shape_cast %88 : vector<8xf32> to vector<8x1xf32>
    %90 = vector.broadcast %89 : vector<8x1xf32> to vector<8x8xf32>
    %91 = arith.subf %87, %90 : vector<8x8xf32>
    %92 = math.exp %91 : vector<8x8xf32>
    %cst_46 = arith.constant dense<0.000000e+00> : vector<8xf32>
    %93 = vector.multi_reduction <add>, %92, %cst_46 [1] : vector<8x8xf32> to vector<8xf32>
    %94 = vector.shape_cast %93 : vector<8xf32> to vector<8x1xf32>
    %95 = arith.truncf %92 : vector<8x8xf32> to vector<8x8xbf16>
    %96 = vector.extract_strided_slice %17 {offsets = [0, 24], sizes = [8, 8], strides = [1, 1]} : vector<8x32xbf16> to vector<8x8xbf16>
    %cst_47 = arith.constant dense<0.000000e+00> : vector<8x8xf32>
    %97 = tpu.matmul %95, %96, %cst_47 {dimension_numbers = #tpu.dot_dimension_numbers<[1], [0], [0], [1], [0, 0, 1, 1], [], []>} : vector<8x8xbf16>, vector<8x8xbf16>, vector<8x8xf32> -> vector<8x8xf32>
    %98 = tpu.reciprocal %94 {approx = true} : vector<8x1xf32> -> vector<8x1xf32>
    %99 = vector.broadcast %98 : vector<8x1xf32> to vector<8x8xf32>
    %100 = arith.mulf %97, %99 : vector<8x8xf32>
    %101 = arith.truncf %100 : vector<8x8xf32> to vector<8x8xbf16>
    %102 = tpu.concatenate %38, %59, %80, %101 in 1 : vector<8x8xbf16>, vector<8x8xbf16>, vector<8x8xbf16>, vector<8x8xbf16> -> vector<8x32xbf16>
    %c0_48 = arith.constant 0 : index
    %c0_49 = arith.constant 0 : index
    %c0_50 = arith.constant 0 : index
    %103 = vector.load %arg9[%c0_48, %c0_49, %c0_50] : memref<1x32x32xbf16, #tpu.memory_space<vmem>>, vector<1x32x32xbf16>
    %104 = vector.shape_cast %103 : vector<1x32x32xbf16> to vector<32x32xbf16>
    %cst_51 = arith.constant dense<0.000000e+00> : vector<8x32xf32>
    %105 = tpu.matmul %102, %104, %cst_51 {dimension_numbers = #tpu.dot_dimension_numbers<[1], [0], [0], [1], [0, 0, 1, 1], [], []>} : vector<8x32xbf16>, vector<32x32xbf16>, vector<8x32xf32> -> vector<8x32xf32>
    %c0_i32 = arith.constant 0 : i32
    %106 = arith.cmpi eq, %arg1, %c0_i32 : i32
    %107 = arith.extui %106 : i1 to i32
    %c0_i32_52 = arith.constant 0 : i32
    %108 = arith.cmpi ne, %107, %c0_i32_52 : i32
    scf.if %108 {
      %c0_55 = arith.constant 0 : index
      %c0_56 = arith.constant 0 : index
      %112 = vector.load %arg10[%c0_55, %c0_56] : memref<1x32xf32, #tpu.memory_space<vmem>>, vector<1x32xf32>
      %113 = vector.broadcast %112 : vector<1x32xf32> to vector<8x32xf32>
      %114 = arith.addf %105, %113 : vector<8x32xf32>
      %c0_57 = arith.constant 0 : index
      %c0_58 = arith.constant 0 : index
      %c0_59 = arith.constant 0 : index
      %115 = vector.load %arg11[%c0_57, %c0_58, %c0_59] : memref<1x8x32xf32, #tpu.memory_space<vmem>>, vector<1x8x32xf32>
      %116 = vector.shape_cast %115 : vector<1x8x32xf32> to vector<8x32xf32>
      %117 = vector.shape_cast %114 : vector<8x32xf32> to vector<1x8x32xf32>
      tpu.vector_store %arg11[%c0_57, %c0_58, %c0_59], %117 {strides = array<i32>} : memref<1x8x32xf32, #tpu.memory_space<vmem>>, vector<1x8x32xf32>,
    } else {
    }
    %c0_i32_53 = arith.constant 0 : i32
    %109 = arith.cmpi sgt, %arg1, %c0_i32_53 : i32
    %110 = arith.extui %109 : i1 to i32
    %c0_i32_54 = arith.constant 0 : i32
    %111 = arith.cmpi ne, %110, %c0_i32_54 : i32
    scf.if %111 {
      %c0_55 = arith.constant 0 : index
      %c0_56 = arith.constant 0 : index
      %c0_57 = arith.constant 0 : index
      %112 = vector.load %arg11[%c0_55, %c0_56, %c0_57] : memref<1x8x32xf32, #tpu.memory_space<vmem>>, vector<1x8x32xf32>
      %113 = vector.shape_cast %112 : vector<1x8x32xf32> to vector<8x32xf32>
      %114 = arith.addf %113, %105 : vector<8x32xf32>
      %c0_58 = arith.constant 0 : index
      %c0_59 = arith.constant 0 : index
      %c0_60 = arith.constant 0 : index
      %115 = vector.load %arg11[%c0_58, %c0_59, %c0_60] : memref<1x8x32xf32, #tpu.memory_space<vmem>>, vector<1x8x32xf32>
      %116 = vector.shape_cast %115 : vector<1x8x32xf32> to vector<8x32xf32>
      %117 = vector.shape_cast %114 : vector<8x32xf32> to vector<1x8x32xf32>
      tpu.vector_store %arg11[%c0_58, %c0_59, %c0_60], %117 {strides = array<i32>} : memref<1x8x32xf32, #tpu.memory_space<vmem>>, vector<1x8x32xf32>,
    } else {
    }
    return
  }
  func.func @transform_0(%arg0: i32, %arg1: i32) -> (i32, i32, i32) {
    %c0_i32 = arith.constant 0 : i32
    %c0_i32_0 = arith.constant 0 : i32
    %c0_i32_1 = arith.constant 0 : i32
    return %arg0, %c0_i32, %c0_i32_0 : i32, i32, i32
  }
  func.func @transform_1(%arg0: i32, %arg1: i32) -> (i32, i32, i32) {
    %c0_i32 = arith.constant 0 : i32
    %c0_i32_0 = arith.constant 0 : i32
    %c0_i32_1 = arith.constant 0 : i32
    return %arg0, %c0_i32, %c0_i32_0 : i32, i32, i32
  }
  func.func @transform_2(%arg0: i32, %arg1: i32) -> (i32, i32, i32) {
    %c0_i32 = arith.constant 0 : i32
    %c0_i32_0 = arith.constant 0 : i32
    %c0_i32_1 = arith.constant 0 : i32
    return %arg0, %c0_i32, %c0_i32_0 : i32, i32, i32
  }
  func.func @transform_3(%arg0: i32, %arg1: i32) -> (i32, i32, i32, i32) {
    %c0_i32 = arith.constant 0 : i32
    %c0_i32_0 = arith.constant 0 : i32
    %c0_i32_1 = arith.constant 0 : i32
    return %arg0, %arg1, %c0_i32, %c0_i32_0 : i32, i32, i32, i32
  }
  func.func @transform_4(%arg0: i32, %arg1: i32) -> (i32, i32, i32) {
    %c0_i32 = arith.constant 0 : i32
    %c0_i32_0 = arith.constant 0 : i32
    %c0_i32_1 = arith.constant 0 : i32
    return %arg1, %c0_i32, %c0_i32_0 : i32, i32, i32
  }
  func.func @transform_5(%arg0: i32, %arg1: i32) -> (i32, i32, i32) {
    %c0_i32 = arith.constant 0 : i32
    %c0_i32_0 = arith.constant 0 : i32
    %c0_i32_1 = arith.constant 0 : i32
    return %arg1, %c0_i32, %c0_i32_0 : i32, i32, i32
  }
  func.func @transform_6(%arg0: i32, %arg1: i32) -> (i32, i32, i32) {
    %c0_i32 = arith.constant 0 : i32
    %c0_i32_0 = arith.constant 0 : i32
    %c0_i32_1 = arith.constant 0 : i32
    return %arg1, %c0_i32, %c0_i32_0 : i32, i32, i32
  }
  func.func @transform_7(%arg0: i32, %arg1: i32) -> (i32, i32, i32) {
    %c0_i32 = arith.constant 0 : i32
    %c0_i32_0 = arith.constant 0 : i32
    %c0_i32_1 = arith.constant 0 : i32
    return %arg1, %c0_i32, %c0_i32_0 : i32, i32, i32
  }
  func.func @transform_8(%arg0: i32, %arg1: i32) -> (i32, i32) {
    %c0_i32 = arith.constant 0 : i32
    %c0_i32_0 = arith.constant 0 : i32
    %c0_i32_1 = arith.constant 0 : i32
    return %c0_i32, %c0_i32_0 : i32, i32
  }
  func.func @transform_9(%arg0: i32, %arg1: i32) -> (i32, i32, i32) {
    %c0_i32 = arith.constant 0 : i32
    %c0_i32_0 = arith.constant 0 : i32
    %c0_i32_1 = arith.constant 0 : i32
    return %arg0, %c0_i32, %c0_i32_0 : i32, i32, i32
  }
}

</mosaic_0001>

<llo_original>
// kernel: tpu_custom_call.1
$region0: #{tpu_custom_call.1}
  #allocation0 [shape = 'u32[]', space=smem, size = 0x4, offset = 0x4, fixed_abs, tag = 'smem constant byte address 0x4 - core index']
  #allocation1 [shape = 'u32[144,128]{1,0:T(1,128)}', space=vmem, size = 0x12000, scoped, tag = 'internal scratch']
  %s0 = inlined_call_operand.hbm [shape: bf16[2,8,32], index: 0, kind: input, shape index: {}]
  %s1 = inlined_call_operand.hbm [shape: bf16[2,8,32], index: 1, kind: input, shape index: {}]
  %s2 = inlined_call_operand.hbm [shape: bf16[2,8,32], index: 2, kind: input, shape index: {}]
  %s3 = inlined_call_operand.hbm [shape: bf16[2,4,8,8], index: 3, kind: input, shape index: {}]
  %s4 = inlined_call_operand.hbm [shape: bf16[1,32,32], index: 4, kind: input, shape index: {}]
  %s5 = inlined_call_operand.vmem [shape: bf16[1,32,32], index: 5, kind: input, shape index: {}]
  %s6 = inlined_call_operand.hbm [shape: bf16[1,32,32], index: 6, kind: input, shape index: {}]
  %s7 = inlined_call_operand.hbm [shape: bf16[1,32,32], index: 7, kind: input, shape index: {}]
  %s8 = inlined_call_operand.vmem [shape: f32[1,32], index: 8, kind: input, shape index: {}]
  %s9 = inlined_call_operand.hbm [shape: f32[2,8,32], index: 9, kind: output, shape index: {}]
  %s10 = sld [smem:[#allocation0]]
  $region105: #{tpu_custom_call.1} parent=0
    _
  %s12 = ssub.s32 1, %s10
  %s13 = scalar_select 0, %s12, %s10
  $region1: #{tpu_custom_call.1} parent=0
    #allocation2 [shape = 'u8[4096]{0}', space=vmem, size = 0x1000, scoped, tag = 'input window, operand 0']
    #allocation3 [shape = 's32[2]{0}', space=sflag, size = 0x8, scoped, tag = 'scoped memory for tpu_custom_call.1']
    #allocation4 [shape = 's32[2]{0}', space=sflag, size = 0x8, scoped, tag = 'scoped memory for tpu_custom_call.1']
    #allocation5 [shape = 'u8[4096]{0}', space=vmem, size = 0x1000, scoped, tag = 'input window, operand 1']
    #allocation6 [shape = 's32[2]{0}', space=sflag, size = 0x8, scoped, tag = 'scoped memory for tpu_custom_call.1']
    #allocation7 [shape = 'u8[4096]{0}', space=vmem, size = 0x1000, scoped, tag = 'input window, operand 2']
    #allocation8 [shape = 'u8[16384]{0}', space=vmem, size = 0x4000, scoped, tag = 'input window, operand 3']
    #allocation9 [shape = 's32[2]{0}', space=sflag, size = 0x8, scoped, tag = 'scoped memory for tpu_custom_call.1']
    #allocation10 [shape = 'u8[8192]{0}', space=vmem, size = 0x2000, scoped, tag = 'input window, operand 4, single buffered']
    #allocation11 [shape = 'u8[8192]{0}', space=vmem, size = 0x2000, scoped, tag = 'input window, operand 6, single buffered']
    #allocation12 [shape = 's32[1]{0}', space=sflag, size = 0x4, scoped, tag = 'scoped memory for tpu_custom_call.1']
    #allocation13 [shape = 'u8[8192]{0}', space=vmem, size = 0x2000, scoped, tag = 'input window, operand 7, single buffered']
    #allocation14 [shape = 'u8[8192]{0}', space=vmem, size = 0x2000, scoped, tag = 'output window, operand 0']
    %14 = vsyncpa [#allocation3], 0
    %s15 = scalar_lea.sflag [#allocation3], 1
    %16 = vsyncpa %s15, 0
    %17 = vsyncpa [#allocation6], 0
    %s18 = scalar_lea.sflag [#allocation6], 1
    %19 = vsyncpa %s18, 0
    %20 = vsyncpa [#allocation9], 0
    %s21 = scalar_lea.sflag [#allocation9], 1
    %22 = vsyncpa %s21, 0
    %23 = vsyncpa [#allocation12], 0
    %24 = vsyncpa [#allocation4], 0
    %s25 = scalar_lea.sflag [#allocation4], 1
    %26 = vsyncpa %s25, 0
    loop: start=0, step=1, limit=4
    $region2: #{tpu_custom_call.1} parent=1 // loop_pre_header
      _
    $region3: #{tpu_custom_call.1} parent=1 // loop_header
      %s28 = sphi 0, %s32
      %p29 = scmp.ge.s32.totalorder %s28, 4
      %s35 = sphi 0, %s47
      %s36 = sphi 0, %s43
      %s37 = sphi 0, %s35
      %s38 = sphi 0, %s36
      %s39 = sphi 0, %s37
      %s40 = sphi 0, %s38
      %s50 = sphi 0, %s52
      %s53 = sphi 0, %s50
      %s54 = sphi 0, %s53
      %s70 = sphi 0, %s54
      %s76 = sphi 0, %s78
      %s79 = sphi 0, %s76
      %s80 = sphi 0, %s79
      %s96 = sphi 0, %s80
      %s102 = sphi 0, %s104
      %s105 = sphi 0, %s102
      %s106 = sphi 0, %s105
      %s122 = sphi 0, %s106
      %s130 = sphi 0, %s132
      %s133 = sphi 0, %s130
      %s134 = sphi 0, %s133
      %s150 = sphi 0, %s134
      %s156 = sphi 0, %s158
      %s159 = sphi 0, %s156
      %s160 = sphi 0, %s159
      %s176 = sphi 0, %s160
      %s182 = sphi 0, %s184
      %s185 = sphi 0, %s182
      %s186 = sphi 0, %s185
      %s202 = sphi 0, %s186
      %s208 = sphi 0, %s210
      %s211 = sphi 0, %s208
      %s212 = sphi 0, %s211
      %s228 = sphi 0, %s212
      %s234 = sphi 0, %s236
      %s237 = sphi 0, %s234
      %s238 = sphi 0, %s237
      %s254 = sphi 0, %s238
      %s258 = sphi 0, %s258
      %s260 = sphi 0, %s258
      %s261 = sphi 0, %s260
      %s275 = sphi 0, %s261
      %s281 = sphi 0, %s283
      %s284 = sphi 0, %s281
      %s285 = sphi 0, %s284
      %s301 = sphi 0, %s285
    $region4: #{tpu_custom_call.1} parent=1 // loop_header_branch
      %31 = sbr.rel (%p29) target = $region8
    $region5: #{tpu_custom_call.1} parent=1 // loop_body
      %s33 = ssub.s32 %s28, 1
      %s34 = ssub.s32 %s28, 2
      %s41 = sadd.s32 1, %s36
      %p42 = scmp.ge.s32.totalorder %s41, 1
      %s43 = scalar_select %p42, 0, %s41
      %s44 = sadd.s32 1, %s35
      %s45 = scalar_select %p42, %s44, %s35
      %p46 = scmp.ge.s32.totalorder %s45, 2
      %s47 = scalar_select %p46, 0, %s45
      %s48 = ssub.s32 %s35, %s47
      %p49 = scmp.eq.s32.totalorder %s48, 0
      %s51 = sadd.s32 %s50, 1
      %s52 = scalar_select %p49, %s50, %s51
      %p55 = pneg %p49
      %p56 = scmp.eq.s32.totalorder %s28, 1
      %p57 = por %p55, %p56
      %p58 = scmp.ne.s32.totalorder %s50, %s53
      %p59 = scmp.eq.s32.totalorder %s28, 0
      %p60 = por %p58, %p59
      %p61 = scmp.ne.s32.totalorder %s50, %s53
      %p62 = scmp.eq.s32.totalorder %s33, 1
      %p63 = por %p61, %p62
      %p64 = scmp.ne.s32.totalorder %s53, %s54
      %p65 = scmp.eq.s32.totalorder %s33, 0
      %p66 = por %p64, %p65
      %p67 = scmp.ne.s32.totalorder %s53, %s54
      %p68 = scmp.eq.s32.totalorder %s34, 1
      %p69 = por %p67, %p68
      %p71 = scmp.ne.s32.totalorder %s54, %s70
      %p72 = scmp.eq.s32.totalorder %s34, 0
      %p73 = por %p71, %p72
      %s74 = ssub.s32 %s35, %s47
      %p75 = scmp.eq.s32.totalorder %s74, 0
      %s77 = sadd.s32 %s76, 1
      %s78 = scalar_select %p75, %s76, %s77
      %p81 = pneg %p75
      %p82 = scmp.eq.s32.totalorder %s28, 1
      %p83 = por %p81, %p82
      %p84 = scmp.ne.s32.totalorder %s76, %s79
      %p85 = scmp.eq.s32.totalorder %s28, 0
      %p86 = por %p84, %p85
      %p87 = scmp.ne.s32.totalorder %s76, %s79
      %p88 = scmp.eq.s32.totalorder %s33, 1
      %p89 = por %p87, %p88
      %p90 = scmp.ne.s32.totalorder %s79, %s80
      %p91 = scmp.eq.s32.totalorder %s33, 0
      %p92 = por %p90, %p91
      %p93 = scmp.ne.s32.totalorder %s79, %s80
      %p94 = scmp.eq.s32.totalorder %s34, 1
      %p95 = por %p93, %p94
      %p97 = scmp.ne.s32.totalorder %s80, %s96
      %p98 = scmp.eq.s32.totalorder %s34, 0
      %p99 = por %p97, %p98
      %s100 = ssub.s32 %s35, %s47
      %p101 = scmp.eq.s32.totalorder %s100, 0
      %s103 = sadd.s32 %s102, 1
      %s104 = scalar_select %p101, %s102, %s103
      %p107 = pneg %p101
      %p108 = scmp.eq.s32.totalorder %s28, 1
      %p109 = por %p107, %p108
      %p110 = scmp.ne.s32.totalorder %s102, %s105
      %p111 = scmp.eq.s32.totalorder %s28, 0
      %p112 = por %p110, %p111
      %p113 = scmp.ne.s32.totalorder %s102, %s105
      %p114 = scmp.eq.s32.totalorder %s33, 1
      %p115 = por %p113, %p114
      %p116 = scmp.ne.s32.totalorder %s105, %s106
      %p117 = scmp.eq.s32.totalorder %s33, 0
      %p118 = por %p116, %p117
      %p119 = scmp.ne.s32.totalorder %s105, %s106
      %p120 = scmp.eq.s32.totalorder %s34, 1
      %p121 = por %p119, %p120
      %p123 = scmp.ne.s32.totalorder %s106, %s122
      %p124 = scmp.eq.s32.totalorder %s34, 0
      %p125 = por %p123, %p124
      %s126 = ssub.s32 %s35, %s47
      %s127 = ssub.s32 %s36, %s43
      %s128 = sor.u32 %s126, %s127
      %p129 = scmp.eq.s32.totalorder %s128, 0
      %s131 = sadd.s32 %s130, 1
      %s132 = scalar_select %p129, %s130, %s131
      %p135 = pneg %p129
      %p136 = scmp.eq.s32.totalorder %s28, 1
      %p137 = por %p135, %p136
      %p138 = scmp.ne.s32.totalorder %s130, %s133
      %p139 = scmp.eq.s32.totalorder %s28, 0
      %p140 = por %p138, %p139
      %p141 = scmp.ne.s32.totalorder %s130, %s133
      %p142 = scmp.eq.s32.totalorder %s33, 1
      %p143 = por %p141, %p142
      %p144 = scmp.ne.s32.totalorder %s133, %s134
      %p145 = scmp.eq.s32.totalorder %s33, 0
      %p146 = por %p144, %p145
      %p147 = scmp.ne.s32.totalorder %s133, %s134
      %p148 = scmp.eq.s32.totalorder %s34, 1
      %p149 = por %p147, %p148
      %p151 = scmp.ne.s32.totalorder %s134, %s150
      %p152 = scmp.eq.s32.totalorder %s34, 0
      %p153 = por %p151, %p152
      %s154 = ssub.s32 %s36, %s43
      %p155 = scmp.eq.s32.totalorder %s154, 0
      %s157 = sadd.s32 %s156, 1
      %s158 = scalar_select %p155, %s156, %s157
      %p161 = pneg %p155
      %p162 = scmp.eq.s32.totalorder %s28, 1
      %p163 = por %p161, %p162
      %p164 = scmp.ne.s32.totalorder %s156, %s159
      %p165 = scmp.eq.s32.totalorder %s28, 0
      %p166 = por %p164, %p165
      %p167 = scmp.ne.s32.totalorder %s156, %s159
      %p168 = scmp.eq.s32.totalorder %s33, 1
      %p169 = por %p167, %p168
      %p170 = scmp.ne.s32.totalorder %s159, %s160
      %p171 = scmp.eq.s32.totalorder %s33, 0
      %p172 = por %p170, %p171
      %p173 = scmp.ne.s32.totalorder %s159, %s160
      %p174 = scmp.eq.s32.totalorder %s34, 1
      %p175 = por %p173, %p174
      %p177 = scmp.ne.s32.totalorder %s160, %s176
      %p178 = scmp.eq.s32.totalorder %s34, 0
      %p179 = por %p177, %p178
      %s180 = ssub.s32 %s36, %s43
      %p181 = scmp.eq.s32.totalorder %s180, 0
      %s183 = sadd.s32 %s182, 1
      %s184 = scalar_select %p181, %s182, %s183
      %p187 = pneg %p181
      %p188 = scmp.eq.s32.totalorder %s28, 1
      %p189 = por %p187, %p188
      %p190 = scmp.ne.s32.totalorder %s182, %s185
      %p191 = scmp.eq.s32.totalorder %s28, 0
      %p192 = por %p190, %p191
      %p193 = scmp.ne.s32.totalorder %s182, %s185
      %p194 = scmp.eq.s32.totalorder %s33, 1
      %p195 = por %p193, %p194
      %p196 = scmp.ne.s32.totalorder %s185, %s186
      %p197 = scmp.eq.s32.totalorder %s33, 0
      %p198 = por %p196, %p197
      %p199 = scmp.ne.s32.totalorder %s185, %s186
      %p200 = scmp.eq.s32.totalorder %s34, 1
      %p201 = por %p199, %p200
      %p203 = scmp.ne.s32.totalorder %s186, %s202
      %p204 = scmp.eq.s32.totalorder %s34, 0
      %p205 = por %p203, %p204
      %s206 = ssub.s32 %s36, %s43
      %p207 = scmp.eq.s32.totalorder %s206, 0
      %s209 = sadd.s32 %s208, 1
      %s210 = scalar_select %p207, %s208, %s209
      %p213 = pneg %p207
      %p214 = scmp.eq.s32.totalorder %s28, 1
      %p215 = por %p213, %p214
      %p216 = scmp.ne.s32.totalorder %s208, %s211
      %p217 = scmp.eq.s32.totalorder %s28, 0
      %p218 = por %p216, %p217
      %p219 = scmp.ne.s32.totalorder %s208, %s211
      %p220 = scmp.eq.s32.totalorder %s33, 1
      %p221 = por %p219, %p220
      %p222 = scmp.ne.s32.totalorder %s211, %s212
      %p223 = scmp.eq.s32.totalorder %s33, 0
      %p224 = por %p222, %p223
      %p225 = scmp.ne.s32.totalorder %s211, %s212
      %p226 = scmp.eq.s32.totalorder %s34, 1
      %p227 = por %p225, %p226
      %p229 = scmp.ne.s32.totalorder %s212, %s228
      %p230 = scmp.eq.s32.totalorder %s34, 0
      %p231 = por %p229, %p230
      %s232 = ssub.s32 %s36, %s43
      %p233 = scmp.eq.s32.totalorder %s232, 0
      %s235 = sadd.s32 %s234, 1
      %s236 = scalar_select %p233, %s234, %s235
      %p239 = pneg %p233
      %p240 = scmp.eq.s32.totalorder %s28, 1
      %p241 = por %p239, %p240
      %p242 = scmp.ne.s32.totalorder %s234, %s237
      %p243 = scmp.eq.s32.totalorder %s28, 0
      %p244 = por %p242, %p243
      %p245 = scmp.ne.s32.totalorder %s234, %s237
      %p246 = scmp.eq.s32.totalorder %s33, 1
      %p247 = por %p245, %p246
      %p248 = scmp.ne.s32.totalorder %s237, %s238
      %p249 = scmp.eq.s32.totalorder %s33, 0
      %p250 = por %p248, %p249
      %p251 = scmp.ne.s32.totalorder %s237, %s238
      %p252 = scmp.eq.s32.totalorder %s34, 1
      %p253 = por %p251, %p252
      %p255 = scmp.ne.s32.totalorder %s238, %s254
      %p256 = scmp.eq.s32.totalorder %s34, 0
      %p257 = por %p255, %p256
      %s259 = sadd.s32 %s258, 1
      %p262 = scmp.eq.s32.totalorder %s28, 1
      %p263 = scmp.ne.s32.totalorder %s258, %s260
      %p264 = scmp.eq.s32.totalorder %s28, 0
      %p265 = por %p263, %p264
      %p266 = scmp.ne.s32.totalorder %s258, %s260
      %p267 = scmp.eq.s32.totalorder %s33, 1
      %p268 = por %p266, %p267
      %p269 = scmp.ne.s32.totalorder %s260, %s261
      %p270 = scmp.eq.s32.totalorder %s33, 0
      %p271 = por %p269, %p270
      %p272 = scmp.ne.s32.totalorder %s260, %s261
      %p273 = scmp.eq.s32.totalorder %s34, 1
      %p274 = por %p272, %p273
      %p276 = scmp.ne.s32.totalorder %s261, %s275
      %p277 = scmp.eq.s32.totalorder %s34, 0
      %p278 = por %p276, %p277
      %s279 = ssub.s32 %s35, %s47
      %p280 = scmp.eq.s32.totalorder %s279, 0
      %s282 = sadd.s32 %s281, 1
      %s283 = scalar_select %p280, %s281, %s282
      %p286 = pneg %p280
      %p287 = scmp.eq.s32.totalorder %s28, 1
      %p288 = por %p286, %p287
      %p289 = scmp.ne.s32.totalorder %s281, %s284
      %p290 = scmp.eq.s32.totalorder %s28, 0
      %p291 = por %p289, %p290
      %p292 = scmp.ne.s32.totalorder %s281, %s284
      %p293 = scmp.eq.s32.totalorder %s33, 1
      %p294 = por %p292, %p293
      %p295 = scmp.ne.s32.totalorder %s284, %s285
      %p296 = scmp.eq.s32.totalorder %s33, 0
      %p297 = por %p295, %p296
      %p298 = scmp.ne.s32.totalorder %s284, %s285
      %p299 = scmp.eq.s32.totalorder %s34, 1
      %p300 = por %p298, %p299
      %p302 = scmp.ne.s32.totalorder %s285, %s301
      %p303 = scmp.eq.s32.totalorder %s34, 0
      %p304 = por %p302, %p303
      %p305 = scmp.le.s32.totalorder 1, %s28
      %p306 = scmp.lt.s32.totalorder %s28, 3
      %p307 = pnand %p305, %p306
      %p308 = pneg %p307
      // Predicated region
      $region9: #{tpu_custom_call.1} parent=5 // pred_check
        _
      $region10: #{tpu_custom_call.1} parent=5 // pred_check_branch
        %310 = sbr.rel (%p307) target = $region12
      $region11: #{tpu_custom_call.1} parent=5 // pred_region
        %s311 = ssub.s32 %s28, 1
        // Predicated region
        $region13: #{tpu_custom_call.1} parent=11 // pred_check
          %p312 = pneg %p172
        $region14: #{tpu_custom_call.1} parent=11 // pred_check_branch
          %314 = sbr.rel (%p312) target = $region16
        $region15: #{tpu_custom_call.1} parent=11 // pred_region
          %s316 = ssub.s32 256, 256
          %317 = vsyncadd [#allocation9], %s316
          %s318 = smul.addr %s38, 4
          %s319 = smul.addr %s318, 64
          %s320 = scalar_lea.hbm %s4, %s319
          %s321 = sshll.u32 [#allocation10], 4
          %s322 = int_to_ptr.vmem [resolvable:$true] %s321
          %327 = dma.hbm_to_vmem [thread:$0]  %s320, 256, %s322, [#allocation9], 64, 64, 4
        $region16: #{tpu_custom_call.1} parent=11 // pred_fallthru
          _
        // Predicated region
        $region17: #{tpu_custom_call.1} parent=11 // pred_check
          %p328 = pneg %p198
        $region18: #{tpu_custom_call.1} parent=11 // pred_check_branch
          %330 = sbr.rel (%p328) target = $region20
        $region19: #{tpu_custom_call.1} parent=11 // pred_region
          %p331 = scmp.lt.s32.totalorder %s38, 0
          %s332 = scalar_select %p331, %s38, 0
          %s333 = smul.addr %s332, 4
          %s334 = smul.addr %s333, 4
          %s335 = scalar_lea.vmem %s5, %s334
        $region20: #{tpu_custom_call.1} parent=11 // pred_fallthru
          _
        // Predicated region
        $region21: #{tpu_custom_call.1} parent=11 // pred_check
          %p336 = pneg %p224
        $region22: #{tpu_custom_call.1} parent=11 // pred_check_branch
          %338 = sbr.rel (%p336) target = $region24
        $region23: #{tpu_custom_call.1} parent=11 // pred_region
          %s340 = ssub.s32 256, 256
          %341 = vsyncadd [#allocation12], %s340
          %s342 = smul.addr %s38, 4
          %s343 = smul.addr %s342, 64
          %s344 = scalar_lea.hbm %s6, %s343
          %s345 = sshll.u32 [#allocation11], 4
          %s346 = int_to_ptr.vmem [resolvable:$true] %s345
          %351 = dma.hbm_to_vmem [thread:$0]  %s344, 256, %s346, [#allocation12], 64, 64, 4
        $region24: #{tpu_custom_call.1} parent=11 // pred_fallthru
          _
        // Predicated region
        $region25: #{tpu_custom_call.1} parent=11 // pred_check
          %p352 = pneg %p250
        $region26: #{tpu_custom_call.1} parent=11 // pred_check_branch
          %354 = sbr.rel (%p352) target = $region28
        $region27: #{tpu_custom_call.1} parent=11 // pred_region
          %s356 = ssub.s32 256, 256
          %357 = vsyncadd [#allocation12], %s356
          %s358 = smul.addr %s38, 4
          %s359 = smul.addr %s358, 64
          %s360 = scalar_lea.hbm %s7, %s359
          %s361 = sshll.u32 [#allocation13], 4
          %s362 = int_to_ptr.vmem [resolvable:$true] %s361
          %367 = dma.hbm_to_vmem [thread:$0]  %s360, 256, %s362, [#allocation12], 64, 64, 4
        $region28: #{tpu_custom_call.1} parent=11 // pred_fallthru
          _
        // Predicated region
        $region29: #{tpu_custom_call.1} parent=11 // pred_check
          %p368 = pneg %p271
        $region30: #{tpu_custom_call.1} parent=11 // pred_check_branch
          %370 = sbr.rel (%p368) target = $region32
        $region31: #{tpu_custom_call.1} parent=11 // pred_region
          _
        $region32: #{tpu_custom_call.1} parent=11 // pred_fallthru
          _
      $region12: #{tpu_custom_call.1} parent=5 // pred_fallthru
        _
      %p371 = scmp.lt.s32.totalorder %s28, 2
      // Predicated region
      $region33: #{tpu_custom_call.1} parent=5 // pred_check
        %p372 = pneg %p371
      $region34: #{tpu_custom_call.1} parent=5 // pred_check_branch
        %374 = sbr.rel (%p372) target = $region36
      $region35: #{tpu_custom_call.1} parent=5 // pred_region
        // Predicated region
        $region37: #{tpu_custom_call.1} parent=35 // pred_check
          %p375 = pneg %p60
        $region38: #{tpu_custom_call.1} parent=35 // pred_check_branch
          %377 = sbr.rel (%p375) target = $region40
        $region39: #{tpu_custom_call.1} parent=35 // pred_region
          %s378 = sand.u32 %s50, 1
          %s379 = scalar_lea.sflag [#allocation3], %s378
          %s380 = sand.u32 %s50, 1
          %s381 = smul.addr %s380, 4
          %s382 = scalar_lea.vmem [#allocation2], %s381
          %s384 = ssub.s32 64, 64
          %385 = vsyncadd %s379, %s384
          %s386 = smul.addr %s35, 64
          %s387 = scalar_lea.hbm %s0, %s386
          %s389 = sshll.u32 %s382, 4
          %s390 = int_to_ptr.vmem [resolvable:$true] %s389
          %392 = dma.hbm_to_vmem [thread:$0]  %s387, 64, %s390, %s379
        $region40: #{tpu_custom_call.1} parent=35 // pred_fallthru
          _
        // Predicated region
        $region41: #{tpu_custom_call.1} parent=35 // pred_check
          %p393 = pneg %p86
        $region42: #{tpu_custom_call.1} parent=35 // pred_check_branch
          %395 = sbr.rel (%p393) target = $region44
        $region43: #{tpu_custom_call.1} parent=35 // pred_region
          %s396 = sand.u32 %s28, 1
          %s397 = scalar_lea.sflag [#allocation6], %s396
          %s398 = sand.u32 %s76, 1
          %s399 = smul.addr %s398, 4
          %s400 = scalar_lea.vmem [#allocation5], %s399
          %s402 = ssub.s32 64, 64
          %403 = vsyncadd %s397, %s402
          %s404 = smul.addr %s35, 64
          %s405 = scalar_lea.hbm %s1, %s404
          %s407 = sshll.u32 %s400, 4
          %s408 = int_to_ptr.vmem [resolvable:$true] %s407
          %410 = dma.hbm_to_vmem [thread:$0]  %s405, 64, %s408, %s397
        $region44: #{tpu_custom_call.1} parent=35 // pred_fallthru
          _
        // Predicated region
        $region45: #{tpu_custom_call.1} parent=35 // pred_check
          %p411 = pneg %p112
        $region46: #{tpu_custom_call.1} parent=35 // pred_check_branch
          %413 = sbr.rel (%p411) target = $region48
        $region47: #{tpu_custom_call.1} parent=35 // pred_region
          %s414 = sand.u32 %s28, 1
          %s415 = scalar_lea.sflag [#allocation6], %s414
          %s416 = sand.u32 %s102, 1
          %s417 = smul.addr %s416, 4
          %s418 = scalar_lea.vmem [#allocation7], %s417
          %s420 = ssub.s32 64, 64
          %421 = vsyncadd %s415, %s420
          %s422 = smul.addr %s35, 64
          %s423 = scalar_lea.hbm %s2, %s422
          %s425 = sshll.u32 %s418, 4
          %s426 = int_to_ptr.vmem [resolvable:$true] %s425
          %428 = dma.hbm_to_vmem [thread:$0]  %s423, 64, %s426, %s415
        $region48: #{tpu_custom_call.1} parent=35 // pred_fallthru
          _
        // Predicated region
        $region49: #{tpu_custom_call.1} parent=35 // pred_check
          %p429 = pneg %p140
        $region50: #{tpu_custom_call.1} parent=35 // pred_check_branch
          %431 = sbr.rel (%p429) target = $region52
        $region51: #{tpu_custom_call.1} parent=35 // pred_region
          %s432 = sand.u32 %s28, 1
          %s433 = scalar_lea.sflag [#allocation9], %s432
          %s434 = sand.u32 %s130, 1
          %s435 = smul.addr %s434, 16
          %s436 = scalar_lea.vmem [#allocation8], %s435
          %s437 = smul.u32 4, %s36
          %s439 = ssub.s32 256, 256
          %440 = vsyncadd %s433, %s439
          %s441 = smul.addr %s35, 4
          %s442 = sadd.s32 %s437, %s441
          %s443 = smul.addr %s442, 64
          %s444 = scalar_lea.hbm %s3, %s443
          %s445 = sshll.u32 %s436, 4
          %s446 = int_to_ptr.vmem [resolvable:$true] %s445
          %451 = dma.hbm_to_vmem [thread:$0]  %s444, 256, %s446, %s433, 64, 64, 4
        $region52: #{tpu_custom_call.1} parent=35 // pred_fallthru
          _
      $region36: #{tpu_custom_call.1} parent=5 // pred_fallthru
        _
      %p452 = scmp.le.s32.totalorder 1, %s28
      %p453 = scmp.lt.s32.totalorder %s28, 3
      %p454 = pnand %p452, %p453
      %p455 = pneg %p454
      // Predicated region
      $region53: #{tpu_custom_call.1} parent=5 // pred_check
        _
      $region54: #{tpu_custom_call.1} parent=5 // pred_check_branch
        %457 = sbr.rel (%p454) target = $region56
      $region55: #{tpu_custom_call.1} parent=5 // pred_region
        %s458 = ssub.s32 %s28, 1
        %s459 = sand.u32 %s53, 1
        %s460 = scalar_lea.sflag [#allocation3], %s459
        %s461 = sand.u32 %s53, 1
        %s462 = smul.addr %s461, 4
        %s463 = scalar_lea.vmem [#allocation2], %s462
        // Predicated region
        $region57: #{tpu_custom_call.1} parent=55 // pred_check
          %p464 = pneg %p66
        $region58: #{tpu_custom_call.1} parent=55 // pred_check_branch
          %466 = sbr.rel (%p464) target = $region60
        $region59: #{tpu_custom_call.1} parent=55 // pred_region
          %467 = dma.done %s460, 64
        $region60: #{tpu_custom_call.1} parent=55 // pred_fallthru
          _
        %s468 = sand.u32 %s33, 1
        %s469 = scalar_lea.sflag [#allocation6], %s468
        %s470 = sand.u32 %s79, 1
        %s471 = smul.addr %s470, 4
        %s472 = scalar_lea.vmem [#allocation5], %s471
        // Predicated region
        $region61: #{tpu_custom_call.1} parent=55 // pred_check
          %p473 = pneg %p92
        $region62: #{tpu_custom_call.1} parent=55 // pred_check_branch
          %475 = sbr.rel (%p473) target = $region64
        $region63: #{tpu_custom_call.1} parent=55 // pred_region
          %476 = dma.done %s469, 64
        $region64: #{tpu_custom_call.1} parent=55 // pred_fallthru
          _
        %s477 = sand.u32 %s33, 1
        %s478 = scalar_lea.sflag [#allocation6], %s477
        %s479 = sand.u32 %s105, 1
        %s480 = smul.addr %s479, 4
        %s481 = scalar_lea.vmem [#allocation7], %s480
        // Predicated region
        $region65: #{tpu_custom_call.1} parent=55 // pred_check
          %p482 = pneg %p118
        $region66: #{tpu_custom_call.1} parent=55 // pred_check_branch
          %484 = sbr.rel (%p482) target = $region68
        $region67: #{tpu_custom_call.1} parent=55 // pred_region
          %485 = dma.done %s478, 64
        $region68: #{tpu_custom_call.1} parent=55 // pred_fallthru
          _
        %s486 = sand.u32 %s33, 1
        %s487 = scalar_lea.sflag [#allocation9], %s486
        %s488 = sand.u32 %s133, 1
        %s489 = smul.addr %s488, 16
        %s490 = scalar_lea.vmem [#allocation8], %s489
        // Predicated region
        $region69: #{tpu_custom_call.1} parent=55 // pred_check
          %p491 = pneg %p146
        $region70: #{tpu_custom_call.1} parent=55 // pred_check_branch
          %493 = sbr.rel (%p491) target = $region72
        $region71: #{tpu_custom_call.1} parent=55 // pred_region
          %494 = dma.done %s487, 256
        $region72: #{tpu_custom_call.1} parent=55 // pred_fallthru
          _
        // Predicated region
        $region73: #{tpu_custom_call.1} parent=55 // pred_check
          %p495 = pneg %p172
        $region74: #{tpu_custom_call.1} parent=55 // pred_check_branch
          %497 = sbr.rel (%p495) target = $region76
        $region75: #{tpu_custom_call.1} parent=55 // pred_region
          %498 = dma.done [#allocation9], 256
        $region76: #{tpu_custom_call.1} parent=55 // pred_fallthru
          _
        // Predicated region
        $region77: #{tpu_custom_call.1} parent=55 // pred_check
          %p499 = pneg %p224
        $region78: #{tpu_custom_call.1} parent=55 // pred_check_branch
          %501 = sbr.rel (%p499) target = $region80
        $region79: #{tpu_custom_call.1} parent=55 // pred_region
          %502 = dma.done [#allocation12], 256
        $region80: #{tpu_custom_call.1} parent=55 // pred_fallthru
          _
        // Predicated region
        $region81: #{tpu_custom_call.1} parent=55 // pred_check
          %p503 = pneg %p250
        $region82: #{tpu_custom_call.1} parent=55 // pred_check_branch
          %505 = sbr.rel (%p503) target = $region84
        $region83: #{tpu_custom_call.1} parent=55 // pred_region
          %506 = dma.done [#allocation12], 256
        $region84: #{tpu_custom_call.1} parent=55 // pred_fallthru
          _
        %s507 = sand.u32 %s53, 1
        %s508 = scalar_lea.sflag [#allocation3], %s507
        %s509 = sand.u32 %s53, 1
        %s510 = smul.addr %s509, 4
        %s511 = scalar_lea.vmem [#allocation2], %s510
        %p512 = pneg %p66
        %p513 = pneg %p63
        %s514 = sand.u32 %s33, 1
        %s515 = scalar_lea.sflag [#allocation6], %s514
        %s516 = sand.u32 %s79, 1
        %s517 = smul.addr %s516, 4
        %s518 = scalar_lea.vmem [#allocation5], %s517
        %p519 = pneg %p92
        %p520 = pneg %p89
        %s521 = sand.u32 %s33, 1
        %s522 = scalar_lea.sflag [#allocation6], %s521
        %s523 = sand.u32 %s105, 1
        %s524 = smul.addr %s523, 4
        %s525 = scalar_lea.vmem [#allocation7], %s524
        %p526 = pneg %p118
        %p527 = pneg %p115
        %s528 = sand.u32 %s33, 1
        %s529 = scalar_lea.sflag [#allocation9], %s528
        %s530 = sand.u32 %s133, 1
        %s531 = smul.addr %s530, 16
        %s532 = scalar_lea.vmem [#allocation8], %s531
        %p533 = pneg %p146
        %p534 = pneg %p143
        %p535 = pneg %p172
        %p536 = pneg %p169
        %p537 = scmp.lt.s32.totalorder %s38, 0
        %s538 = scalar_select %p537, %s38, 0
        %s539 = smul.addr %s538, 4
        %s540 = smul.addr %s539, 4
        %s541 = scalar_lea.vmem %s5, %s540
        %p542 = pneg %p198
        %p543 = pneg %p195
        %p544 = pneg %p224
        %p545 = pneg %p221
        %p546 = pneg %p250
        %p547 = pneg %p247
        %p548 = pneg %p271
        %p549 = pneg %p268
        %p550 = pneg %p297
        %p551 = pneg %p294
        %s552 = sand.u32 %s284, 1
        %s553 = scalar_lea.sflag [#allocation4], %s552
        %s554 = sand.u32 %s284, 1
        %s555 = smul.addr %s554, 8
        %s556 = scalar_lea.vmem [#allocation14], %s555
        %s557 = smul.u32 4, %s38
        %p558 = scmp.lt.s32.totalorder %s38, 0
        %s559 = scalar_select %p558, %s38, 0
        %s560 = smul.addr %s559, 4
        %s561 = smul.addr %s560, 4
        %s562 = scalar_lea.vmem %s5, %s561
        %v564 = vld [vmem:[%s463] sm:$0xf]
        %v565 = vld [vmem:[#allocation10] sm:$0xf]
        %v566 = vld [vmem:[#allocation10 + $0x4] sm:$0xf]
        %v567 = vld [vmem:[#allocation10 + $0x8] sm:$0xf]
        %v568 = vld [vmem:[#allocation10 + $0xc] sm:$0xf]
        %v573 = vunpack.c.l.b16 %v565
        %v574 = vunpack.c.l.b16 %v566
        %v575 = vunpack.c.l.b16 %v567
        %v576 = vunpack.c.l.b16 %v568
        %v577 = vpack.c.b16 %v574, %v573
        %v578 = vpack.c.b16 %v576, %v575
        %vm581 = vcmask 261120
        %v583 = vsel %vm581, %v564, 0
        %585 = vmatprep.subr.bf16.mxu0 0
        %586 = vmatpush1.bf16.msra.mxu0 %v577
        %587 = vmatprep.subr.bf16.mxu0 0
        %588 = vmatpush1.bf16.msra.mxu0 %v578
        %589 = vmatprep.subr.bf16.mxu0 0
        %590 = vmatpush1.bf16.msra.mxu0 0
        %591 = vmatprep.subr.bf16.mxu0 0
        %592 = vmatpush1.bf16.msra.mxu0 0
        %593 = vmatprep.subr.bf16.mxu0 0
        %594 = vmatpush1.bf16.msra.mxu0 0
        %595 = vmatprep.subr.bf16.mxu0 0
        %596 = vmatpush1.bf16.msra.mxu0 0
        %597 = vmatprep.subr.bf16.mxu0 0
        %598 = vmatpush1.bf16.msra.mxu0 0
        %599 = vmatprep.subr.bf16.mxu0 0
        %600 = vmatpush1.bf16.msra.mxu0 0
        %601 = vmatprep.subr.bf16.mxu0 0
        %602 = vmatpush1.bf16.msra.mxu0 0
        %603 = vmatprep.subr.bf16.mxu0 0
        %604 = vmatpush1.bf16.msra.mxu0 0
        %605 = vmatprep.subr.bf16.mxu0 0
        %606 = vmatpush1.bf16.msra.mxu0 0
        %607 = vmatprep.subr.bf16.mxu0 0
        %608 = vmatpush1.bf16.msra.mxu0 0
        %609 = vmatprep.subr.bf16.mxu0 0
        %610 = vmatpush1.bf16.msra.mxu0 0
        %611 = vmatprep.subr.bf16.mxu0 0
        %612 = vmatpush1.bf16.msra.mxu0 0
        %613 = vmatprep.subr.bf16.mxu0 0
        %614 = vmatpush1.bf16.msra.mxu0 0
        %615 = vmatprep.subr.bf16.mxu0 0
        %616 = vmatpush1.bf16.msra.mxu0 0
        %617 = vmatprep.mubr.bf16.mxu0 0
        %618 = vmatmul.mubr.bf16.gmra.mrb[0].mxu0 %v583
        %v619 = vpop.f32.mrb[0].mxu0
        %v620 = vadd.f32 0.0, %v619
        %v621 = vpop.f32.mrb[0].mxu0
        %v622 = vpop.f32.mrb[0].mxu0
        %v623 = vpop.f32.mrb[0].mxu0
        %624 = vdwg.mxu0
        %v625 = vld [vmem:[%s562] sm:$0xf]
        %v626 = vld [vmem:[%s562 + $0x4] sm:$0xf]
        %v627 = vld [vmem:[%s562 + $0x8] sm:$0xf]
        %v628 = vld [vmem:[%s562 + $0xc] sm:$0xf]
        %v629 = vld [vmem:[%s472] sm:$0xf]
        %v634 = vunpack.c.l.b16 %v625
        %v635 = vunpack.c.l.b16 %v626
        %v636 = vunpack.c.l.b16 %v627
        %v637 = vunpack.c.l.b16 %v628
        %v638 = vpack.c.b16 %v635, %v634
        %v639 = vpack.c.b16 %v637, %v636
        %v641 = vsel %vm581, %v638, 0
        %v644 = vsel %vm581, %v639, 0
        %v647 = vsel %vm581, %v629, 0
        %649 = vmatprep.subr.bf16.mxu0 0
        %650 = vmatpush1.bf16.xpose.msra.mxu0 %v647
        %651 = vmatprep.subr.bf16.mxu0 0
        %652 = vmatpush1.bf16.xpose.msra.mxu0 0
        %653 = vmatprep.subr.bf16.mxu0 0
        %654 = vmatpush1.bf16.xpose.msra.mxu0 0
        %655 = vmatprep.subr.bf16.mxu0 0
        %656 = vmatpush1.bf16.xpose.msra.mxu0 0
        %657 = vmatprep.subr.bf16.mxu0 0
        %658 = vmatpush1.bf16.xpose.msra.mxu0 0
        %659 = vmatprep.subr.bf16.mxu0 0
        %660 = vmatpush1.bf16.xpose.msra.mxu0 0
        %661 = vmatprep.subr.bf16.mxu0 0
        %662 = vmatpush1.bf16.xpose.msra.mxu0 0
        %663 = vmatprep.subr.bf16.mxu0 0
        %664 = vmatpush1.bf16.xpose.msra.mxu0 0
        %665 = vmatprep.subr.bf16.mxu0 0
        %666 = vmatpush1.bf16.xpose.msra.mxu0 0
        %667 = vmatprep.subr.bf16.mxu0 0
        %668 = vmatpush1.bf16.xpose.msra.mxu0 0
        %669 = vmatprep.subr.bf16.mxu0 0
        %670 = vmatpush1.bf16.xpose.msra.mxu0 0
        %671 = vmatprep.subr.bf16.mxu0 0
        %672 = vmatpush1.bf16.xpose.msra.mxu0 0
        %673 = vmatprep.subr.bf16.mxu0 0
        %674 = vmatpush1.bf16.xpose.msra.mxu0 0
        %675 = vmatprep.subr.bf16.mxu0 0
        %676 = vmatpush1.bf16.xpose.msra.mxu0 0
        %677 = vmatprep.subr.bf16.mxu0 0
        %678 = vmatpush1.bf16.xpose.msra.mxu0 0
        %679 = vmatprep.subr.bf16.mxu0 0
        %680 = vmatpush1.bf16.xpose.msra.mxu0 0
        %681 = vmatprep.mubr.bf16.mxu0 0
        %682 = vmatmul.mubr.bf16.gmra.mrb[0].mxu0 %v641
        %v683 = vpop.f32.mrb[0].mxu0
        %v684 = vadd.f32 0.0, %v683
        %v685 = vpop.f32.mrb[0].mxu0
        %v686 = vpop.f32.mrb[0].mxu0
        %v687 = vadd.f32 0.0, %v686
        %v688 = vpop.f32.mrb[0].mxu0
        %689 = vmatprep.mubr.bf16.mxu0 0
        %690 = vmatmul.mubr.bf16.gmra.mrb[0].mxu0 %v644
        %v691 = vpop.f32.mrb[0].mxu0
        %v692 = vadd.f32 0.0, %v691
        %v693 = vpop.f32.mrb[0].mxu0
        %v694 = vpop.f32.mrb[0].mxu0
        %v695 = vadd.f32 0.0, %v694
        %v696 = vpop.f32.mrb[0].mxu0
        %697 = vdwg.mxu0
        %v698 = vld [vmem:[%s481] sm:$0xf]
        %v699 = vld [vmem:[#allocation11] sm:$0xf]
        %v700 = vld [vmem:[#allocation11 + $0x4] sm:$0xf]
        %v701 = vld [vmem:[#allocation11 + $0x8] sm:$0xf]
        %v702 = vld [vmem:[#allocation11 + $0xc] sm:$0xf]
        %v707 = vunpack.c.l.b16 %v699
        %v708 = vunpack.c.l.b16 %v700
        %v709 = vunpack.c.l.b16 %v701
        %v710 = vunpack.c.l.b16 %v702
        %v711 = vpack.c.b16 %v708, %v707
        %v712 = vpack.c.b16 %v710, %v709
        %v716 = vsel %vm581, %v698, 0
        %718 = vmatprep.subr.bf16.mxu0 0
        %719 = vmatpush1.bf16.msra.mxu0 %v711
        %720 = vmatprep.subr.bf16.mxu0 0
        %721 = vmatpush1.bf16.msra.mxu0 %v712
        %722 = vmatprep.subr.bf16.mxu0 0
        %723 = vmatpush1.bf16.msra.mxu0 0
        %724 = vmatprep.subr.bf16.mxu0 0
        %725 = vmatpush1.bf16.msra.mxu0 0
        %726 = vmatprep.subr.bf16.mxu0 0
        %727 = vmatpush1.bf16.msra.mxu0 0
        %728 = vmatprep.subr.bf16.mxu0 0
        %729 = vmatpush1.bf16.msra.mxu0 0
        %730 = vmatprep.subr.bf16.mxu0 0
        %731 = vmatpush1.bf16.msra.mxu0 0
        %732 = vmatprep.subr.bf16.mxu0 0
        %733 = vmatpush1.bf16.msra.mxu0 0
        %734 = vmatprep.subr.bf16.mxu0 0
        %735 = vmatpush1.bf16.msra.mxu0 0
        %736 = vmatprep.subr.bf16.mxu0 0
        %737 = vmatpush1.bf16.msra.mxu0 0
        %738 = vmatprep.subr.bf16.mxu0 0
        %739 = vmatpush1.bf16.msra.mxu0 0
        %740 = vmatprep.subr.bf16.mxu0 0
        %741 = vmatpush1.bf16.msra.mxu0 0
        %742 = vmatprep.subr.bf16.mxu0 0
        %743 = vmatpush1.bf16.msra.mxu0 0
        %744 = vmatprep.subr.bf16.mxu0 0
        %745 = vmatpush1.bf16.msra.mxu0 0
        %746 = vmatprep.subr.bf16.mxu0 0
        %747 = vmatpush1.bf16.msra.mxu0 0
        %748 = vmatprep.subr.bf16.mxu0 0
        %749 = vmatpush1.bf16.msra.mxu0 0
        %750 = vmatprep.mubr.bf16.mxu0 0
        %751 = vmatmul.mubr.bf16.gmra.mrb[0].mxu0 %v716
        %v752 = vpop.f32.mrb[0].mxu0
        %v753 = vadd.f32 0.0, %v752
        %v754 = vpop.f32.mrb[0].mxu0
        %v755 = vpop.f32.mrb[0].mxu0
        %v756 = vpop.f32.mrb[0].mxu0
        %757 = vdwg.mxu0
        %v758 = vpack.c.bf16 %v620, %v620
        %v759 = vpack.c.bf16 %v687, %v684
        %v760 = vpack.c.bf16 %v695, %v692
        %v761 = vpack.c.bf16 %v753, %v753
        %v762 = vld [vmem:[%s490] sm:$0xf]
        %v763 = vunpack.c.l.bf16 %v762
        %vm764 = vcmask 64512
        %v766 = vsel %vm764, %v758, 0
        %vm768 = vcmask 1043456
        %v770 = vsel %vm768, %v759, 0
        %772 = vmatprep.subr.bf16.mxu0 0
        %773 = vmatpush1.bf16.msra.mxu0 %v770
        %774 = vmatprep.subr.bf16.mxu0 0
        %775 = vmatpush1.bf16.msra.mxu0 0
        %776 = vmatprep.subr.bf16.mxu0 0
        %777 = vmatpush1.bf16.msra.mxu0 0
        %778 = vmatprep.subr.bf16.mxu0 0
        %779 = vmatpush1.bf16.msra.mxu0 0
        %780 = vmatprep.subr.bf16.mxu0 0
        %781 = vmatpush1.bf16.msra.mxu0 0
        %782 = vmatprep.subr.bf16.mxu0 0
        %783 = vmatpush1.bf16.msra.mxu0 0
        %784 = vmatprep.subr.bf16.mxu0 0
        %785 = vmatpush1.bf16.msra.mxu0 0
        %786 = vmatprep.subr.bf16.mxu0 0
        %787 = vmatpush1.bf16.msra.mxu0 0
        %788 = vmatprep.subr.bf16.mxu0 0
        %789 = vmatpush1.bf16.msra.mxu0 0
        %790 = vmatprep.subr.bf16.mxu0 0
        %791 = vmatpush1.bf16.msra.mxu0 0
        %792 = vmatprep.subr.bf16.mxu0 0
        %793 = vmatpush1.bf16.msra.mxu0 0
        %794 = vmatprep.subr.bf16.mxu0 0
        %795 = vmatpush1.bf16.msra.mxu0 0
        %796 = vmatprep.subr.bf16.mxu0 0
        %797 = vmatpush1.bf16.msra.mxu0 0
        %798 = vmatprep.subr.bf16.mxu0 0
        %799 = vmatpush1.bf16.msra.mxu0 0
        %800 = vmatprep.subr.bf16.mxu0 0
        %801 = vmatpush1.bf16.msra.mxu0 0
        %802 = vmatprep.subr.bf16.mxu0 0
        %803 = vmatpush1.bf16.msra.mxu0 0
        %804 = vmatprep.mubr.bf16.mxu0 0
        %805 = vmatmul.mubr.bf16.gmra.mrb[0].mxu0 %v766
        %v806 = vpop.f32.mrb[0].mxu0
        %v807 = vadd.f32 %v763, %v806
        %v808 = vpop.f32.mrb[0].mxu0
        %v809 = vpop.f32.mrb[0].mxu0
        %v810 = vpop.f32.mrb[0].mxu0
        %811 = vdwg.mxu0
        %v812 = vsel %vm764, %v807, -inf
        %813 = vmax.xlane.f32.xlu0 %v812
        %v814 = vpop.xlane.xlu0 %813
        %v815 = vsub.f32 %v807, %v814
        %v816 = vmul.f32 %v815, 1.442695
        %v817 = vpow.pop %v816
        %v818 = vsel %vm764, %v817, 0.0
        %819 = vadd.xlane.f32.xlu0 %v818
        %v820 = vpop.xlane.xlu0 %819
        %v821 = vpack.c.bf16 %v817, %v817
        %v823 = vsel %vm764, %v821, 0
        %v826 = vsel %vm768, %v761, 0
        %828 = vmatprep.subr.bf16.mxu0 0
        %829 = vmatpush1.bf16.msra.mxu0 %v826
        %830 = vmatprep.subr.bf16.mxu0 0
        %831 = vmatpush1.bf16.msra.mxu0 0
        %832 = vmatprep.subr.bf16.mxu0 0
        %833 = vmatpush1.bf16.msra.mxu0 0
        %834 = vmatprep.subr.bf16.mxu0 0
        %835 = vmatpush1.bf16.msra.mxu0 0
        %836 = vmatprep.subr.bf16.mxu0 0
        %837 = vmatpush1.bf16.msra.mxu0 0
        %838 = vmatprep.subr.bf16.mxu0 0
        %839 = vmatpush1.bf16.msra.mxu0 0
        %840 = vmatprep.subr.bf16.mxu0 0
        %841 = vmatpush1.bf16.msra.mxu0 0
        %842 = vmatprep.subr.bf16.mxu0 0
        %843 = vmatpush1.bf16.msra.mxu0 0
        %844 = vmatprep.subr.bf16.mxu0 0
        %845 = vmatpush1.bf16.msra.mxu0 0
        %846 = vmatprep.subr.bf16.mxu0 0
        %847 = vmatpush1.bf16.msra.mxu0 0
        %848 = vmatprep.subr.bf16.mxu0 0
        %849 = vmatpush1.bf16.msra.mxu0 0
        %850 = vmatprep.subr.bf16.mxu0 0
        %851 = vmatpush1.bf16.msra.mxu0 0
        %852 = vmatprep.subr.bf16.mxu0 0
        %853 = vmatpush1.bf16.msra.mxu0 0
        %854 = vmatprep.subr.bf16.mxu0 0
        %855 = vmatpush1.bf16.msra.mxu0 0
        %856 = vmatprep.subr.bf16.mxu0 0
        %857 = vmatpush1.bf16.msra.mxu0 0
        %858 = vmatprep.subr.bf16.mxu0 0
        %859 = vmatpush1.bf16.msra.mxu0 0
        %860 = vmatprep.mubr.bf16.mxu0 0
        %861 = vmatmul.mubr.bf16.gmra.mrb[0].mxu0 %v823
        %v862 = vpop.f32.mrb[0].mxu0
        %v863 = vadd.f32 0.0, %v862
        %v864 = vpop.f32.mrb[0].mxu0
        %v865 = vpop.f32.mrb[0].mxu0
        %v866 = vpop.f32.mrb[0].mxu0
        %867 = vdwg.mxu0
        %v868 = vrcp.pop %v820
        %v869 = vmul.f32 %v863, %v868
        %v870 = vpack.c.bf16 %v869, %v869
        %s871 = scalar_lea.vmem %s490, 4 [#allocation8]
        %v872 = vld [vmem:[%s871] sm:$0xf]
        %v873 = vunpack.c.l.bf16 %v872
        %875 = vrot.lane.b32.xlu0 %v758, 120
        %v876 = vpop.permute.xlu0 %875
        %v878 = vrot.slane %v759, 4
        %v880 = vsel %vm764, %v876, 0
        %v883 = vsel %vm768, %v878, 0
        %885 = vmatprep.subr.bf16.mxu0 0
        %886 = vmatpush1.bf16.msra.mxu0 %v883
        %887 = vmatprep.subr.bf16.mxu0 0
        %888 = vmatpush1.bf16.msra.mxu0 0
        %889 = vmatprep.subr.bf16.mxu0 0
        %890 = vmatpush1.bf16.msra.mxu0 0
        %891 = vmatprep.subr.bf16.mxu0 0
        %892 = vmatpush1.bf16.msra.mxu0 0
        %893 = vmatprep.subr.bf16.mxu0 0
        %894 = vmatpush1.bf16.msra.mxu0 0
        %895 = vmatprep.subr.bf16.mxu0 0
        %896 = vmatpush1.bf16.msra.mxu0 0
        %897 = vmatprep.subr.bf16.mxu0 0
        %898 = vmatpush1.bf16.msra.mxu0 0
        %899 = vmatprep.subr.bf16.mxu0 0
        %900 = vmatpush1.bf16.msra.mxu0 0
        %901 = vmatprep.subr.bf16.mxu0 0
        %902 = vmatpush1.bf16.msra.mxu0 0
        %903 = vmatprep.subr.bf16.mxu0 0
        %904 = vmatpush1.bf16.msra.mxu0 0
        %905 = vmatprep.subr.bf16.mxu0 0
        %906 = vmatpush1.bf16.msra.mxu0 0
        %907 = vmatprep.subr.bf16.mxu0 0
        %908 = vmatpush1.bf16.msra.mxu0 0
        %909 = vmatprep.subr.bf16.mxu0 0
        %910 = vmatpush1.bf16.msra.mxu0 0
        %911 = vmatprep.subr.bf16.mxu0 0
        %912 = vmatpush1.bf16.msra.mxu0 0
        %913 = vmatprep.subr.bf16.mxu0 0
        %914 = vmatpush1.bf16.msra.mxu0 0
        %915 = vmatprep.subr.bf16.mxu0 0
        %916 = vmatpush1.bf16.msra.mxu0 0
        %917 = vmatprep.mubr.bf16.mxu0 0
        %918 = vmatmul.mubr.bf16.gmra.mrb[0].mxu0 %v880
        %v919 = vpop.f32.mrb[0].mxu0
        %v920 = vadd.f32 %v873, %v919
        %v921 = vpop.f32.mrb[0].mxu0
        %v922 = vpop.f32.mrb[0].mxu0
        %v923 = vpop.f32.mrb[0].mxu0
        %924 = vdwg.mxu0
        %v925 = vsel %vm764, %v920, -inf
        %926 = vmax.xlane.f32.xlu0 %v925
        %v927 = vpop.xlane.xlu0 %926
        %v928 = vsub.f32 %v920, %v927
        %v929 = vmul.f32 %v928, 1.442695
        %v930 = vpow.pop %v929
        %v931 = vsel %vm764, %v930, 0.0
        %932 = vadd.xlane.f32.xlu0 %v931
        %v933 = vpop.xlane.xlu0 %932
        %v934 = vpack.c.bf16 %v930, %v930
        %936 = vrot.lane.b32.xlu0 %v761, 120
        %v937 = vpop.permute.xlu0 %936
        %v939 = vsel %vm764, %v934, 0
        %v942 = vsel %vm768, %v937, 0
        %944 = vmatprep.subr.bf16.mxu0 0
        %945 = vmatpush1.bf16.msra.mxu0 %v942
        %946 = vmatprep.subr.bf16.mxu0 0
        %947 = vmatpush1.bf16.msra.mxu0 0
        %948 = vmatprep.subr.bf16.mxu0 0
        %949 = vmatpush1.bf16.msra.mxu0 0
        %950 = vmatprep.subr.bf16.mxu0 0
        %951 = vmatpush1.bf16.msra.mxu0 0
        %952 = vmatprep.subr.bf16.mxu0 0
        %953 = vmatpush1.bf16.msra.mxu0 0
        %954 = vmatprep.subr.bf16.mxu0 0
        %955 = vmatpush1.bf16.msra.mxu0 0
        %956 = vmatprep.subr.bf16.mxu0 0
        %957 = vmatpush1.bf16.msra.mxu0 0
        %958 = vmatprep.subr.bf16.mxu0 0
        %959 = vmatpush1.bf16.msra.mxu0 0
        %960 = vmatprep.subr.bf16.mxu0 0
        %961 = vmatpush1.bf16.msra.mxu0 0
        %962 = vmatprep.subr.bf16.mxu0 0
        %963 = vmatpush1.bf16.msra.mxu0 0
        %964 = vmatprep.subr.bf16.mxu0 0
        %965 = vmatpush1.bf16.msra.mxu0 0
        %966 = vmatprep.subr.bf16.mxu0 0
        %967 = vmatpush1.bf16.msra.mxu0 0
        %968 = vmatprep.subr.bf16.mxu0 0
        %969 = vmatpush1.bf16.msra.mxu0 0
        %970 = vmatprep.subr.bf16.mxu0 0
        %971 = vmatpush1.bf16.msra.mxu0 0
        %972 = vmatprep.subr.bf16.mxu0 0
        %973 = vmatpush1.bf16.msra.mxu0 0
        %974 = vmatprep.subr.bf16.mxu0 0
        %975 = vmatpush1.bf16.msra.mxu0 0
        %976 = vmatprep.mubr.bf16.mxu0 0
        %977 = vmatmul.mubr.bf16.gmra.mrb[0].mxu0 %v939
        %v978 = vpop.f32.mrb[0].mxu0
        %v979 = vadd.f32 0.0, %v978
        %v980 = vpop.f32.mrb[0].mxu0
        %v981 = vpop.f32.mrb[0].mxu0
        %v982 = vpop.f32.mrb[0].mxu0
        %983 = vdwg.mxu0
        %v984 = vrcp.pop %v933
        %v985 = vmul.f32 %v979, %v984
        %v986 = vpack.c.bf16 %v985, %v985
        %s987 = scalar_lea.vmem %s490, 8 [#allocation8]
        %v988 = vld [vmem:[%s987] sm:$0xf]
        %v989 = vunpack.c.l.bf16 %v988
        %990 = vrot.lane.b32.xlu0 %v758, 112
        %v991 = vpop.permute.xlu0 %990
        %v993 = vsel %vm764, %v991, 0
        %v996 = vsel %vm768, %v760, 0
        %998 = vmatprep.subr.bf16.mxu0 0
        %999 = vmatpush1.bf16.msra.mxu0 %v996
        %1000 = vmatprep.subr.bf16.mxu0 0
        %1001 = vmatpush1.bf16.msra.mxu0 0
        %1002 = vmatprep.subr.bf16.mxu0 0
        %1003 = vmatpush1.bf16.msra.mxu0 0
        %1004 = vmatprep.subr.bf16.mxu0 0
        %1005 = vmatpush1.bf16.msra.mxu0 0
        %1006 = vmatprep.subr.bf16.mxu0 0
        %1007 = vmatpush1.bf16.msra.mxu0 0
        %1008 = vmatprep.subr.bf16.mxu0 0
        %1009 = vmatpush1.bf16.msra.mxu0 0
        %1010 = vmatprep.subr.bf16.mxu0 0
        %1011 = vmatpush1.bf16.msra.mxu0 0
        %1012 = vmatprep.subr.bf16.mxu0 0
        %1013 = vmatpush1.bf16.msra.mxu0 0
        %1014 = vmatprep.subr.bf16.mxu0 0
        %1015 = vmatpush1.bf16.msra.mxu0 0
        %1016 = vmatprep.subr.bf16.mxu0 0
        %1017 = vmatpush1.bf16.msra.mxu0 0
        %1018 = vmatprep.subr.bf16.mxu0 0
        %1019 = vmatpush1.bf16.msra.mxu0 0
        %1020 = vmatprep.subr.bf16.mxu0 0
        %1021 = vmatpush1.bf16.msra.mxu0 0
        %1022 = vmatprep.subr.bf16.mxu0 0
        %1023 = vmatpush1.bf16.msra.mxu0 0
        %1024 = vmatprep.subr.bf16.mxu0 0
        %1025 = vmatpush1.bf16.msra.mxu0 0
        %1026 = vmatprep.subr.bf16.mxu0 0
        %1027 = vmatpush1.bf16.msra.mxu0 0
        %1028 = vmatprep.subr.bf16.mxu0 0
        %1029 = vmatpush1.bf16.msra.mxu0 0
        %1030 = vmatprep.mubr.bf16.mxu0 0
        %1031 = vmatmul.mubr.bf16.gmra.mrb[0].mxu0 %v993
        %v1032 = vpop.f32.mrb[0].mxu0
        %v1033 = vadd.f32 %v989, %v1032
        %v1034 = vpop.f32.mrb[0].mxu0
        %v1035 = vpop.f32.mrb[0].mxu0
        %v1036 = vpop.f32.mrb[0].mxu0
        %1037 = vdwg.mxu0
        %v1038 = vsel %vm764, %v1033, -inf
        %1039 = vmax.xlane.f32.xlu0 %v1038
        %v1040 = vpop.xlane.xlu0 %1039
        %v1041 = vsub.f32 %v1033, %v1040
        %v1042 = vmul.f32 %v1041, 1.442695
        %v1043 = vpow.pop %v1042
        %v1044 = vsel %vm764, %v1043, 0.0
        %1045 = vadd.xlane.f32.xlu0 %v1044
        %v1046 = vpop.xlane.xlu0 %1045
        %v1047 = vpack.c.bf16 %v1043, %v1043
        %1048 = vrot.lane.b32.xlu0 %v761, 112
        %v1049 = vpop.permute.xlu0 %1048
        %v1051 = vsel %vm764, %v1047, 0
        %v1054 = vsel %vm768, %v1049, 0
        %1056 = vmatprep.subr.bf16.mxu0 0
        %1057 = vmatpush1.bf16.msra.mxu0 %v1054
        %1058 = vmatprep.subr.bf16.mxu0 0
        %1059 = vmatpush1.bf16.msra.mxu0 0
        %1060 = vmatprep.subr.bf16.mxu0 0
        %1061 = vmatpush1.bf16.msra.mxu0 0
        %1062 = vmatprep.subr.bf16.mxu0 0
        %1063 = vmatpush1.bf16.msra.mxu0 0
        %1064 = vmatprep.subr.bf16.mxu0 0
        %1065 = vmatpush1.bf16.msra.mxu0 0
        %1066 = vmatprep.subr.bf16.mxu0 0
        %1067 = vmatpush1.bf16.msra.mxu0 0
        %1068 = vmatprep.subr.bf16.mxu0 0
        %1069 = vmatpush1.bf16.msra.mxu0 0
        %1070 = vmatprep.subr.bf16.mxu0 0
        %1071 = vmatpush1.bf16.msra.mxu0 0
        %1072 = vmatprep.subr.bf16.mxu0 0
        %1073 = vmatpush1.bf16.msra.mxu0 0
        %1074 = vmatprep.subr.bf16.mxu0 0
        %1075 = vmatpush1.bf16.msra.mxu0 0
        %1076 = vmatprep.subr.bf16.mxu0 0
        %1077 = vmatpush1.bf16.msra.mxu0 0
        %1078 = vmatprep.subr.bf16.mxu0 0
        %1079 = vmatpush1.bf16.msra.mxu0 0
        %1080 = vmatprep.subr.bf16.mxu0 0
        %1081 = vmatpush1.bf16.msra.mxu0 0
        %1082 = vmatprep.subr.bf16.mxu0 0
        %1083 = vmatpush1.bf16.msra.mxu0 0
        %1084 = vmatprep.subr.bf16.mxu0 0
        %1085 = vmatpush1.bf16.msra.mxu0 0
        %1086 = vmatprep.subr.bf16.mxu0 0
        %1087 = vmatpush1.bf16.msra.mxu0 0
        %1088 = vmatprep.mubr.bf16.mxu0 0
        %1089 = vmatmul.mubr.bf16.gmra.mrb[0].mxu0 %v1051
        %v1090 = vpop.f32.mrb[0].mxu0
        %v1091 = vadd.f32 0.0, %v1090
        %v1092 = vpop.f32.mrb[0].mxu0
        %v1093 = vpop.f32.mrb[0].mxu0
        %v1094 = vpop.f32.mrb[0].mxu0
        %1095 = vdwg.mxu0
        %v1096 = vrcp.pop %v1046
        %v1097 = vmul.f32 %v1091, %v1096
        %v1098 = vpack.c.bf16 %v1097, %v1097
        %s1099 = scalar_lea.vmem %s490, 12 [#allocation8]
        %v1100 = vld [vmem:[%s1099] sm:$0xf]
        %v1101 = vunpack.c.l.bf16 %v1100
        %1102 = vrot.lane.b32.xlu0 %v758, 104
        %v1103 = vpop.permute.xlu0 %1102
        %v1105 = vrot.slane %v760, 4
        %v1107 = vsel %vm764, %v1103, 0
        %v1110 = vsel %vm768, %v1105, 0
        %1112 = vmatprep.subr.bf16.mxu0 0
        %1113 = vmatpush1.bf16.msra.mxu0 %v1110
        %1114 = vmatprep.subr.bf16.mxu0 0
        %1115 = vmatpush1.bf16.msra.mxu0 0
        %1116 = vmatprep.subr.bf16.mxu0 0
        %1117 = vmatpush1.bf16.msra.mxu0 0
        %1118 = vmatprep.subr.bf16.mxu0 0
        %1119 = vmatpush1.bf16.msra.mxu0 0
        %1120 = vmatprep.subr.bf16.mxu0 0
        %1121 = vmatpush1.bf16.msra.mxu0 0
        %1122 = vmatprep.subr.bf16.mxu0 0
        %1123 = vmatpush1.bf16.msra.mxu0 0
        %1124 = vmatprep.subr.bf16.mxu0 0
        %1125 = vmatpush1.bf16.msra.mxu0 0
        %1126 = vmatprep.subr.bf16.mxu0 0
        %1127 = vmatpush1.bf16.msra.mxu0 0
        %1128 = vmatprep.subr.bf16.mxu0 0
        %1129 = vmatpush1.bf16.msra.mxu0 0
        %1130 = vmatprep.subr.bf16.mxu0 0
        %1131 = vmatpush1.bf16.msra.mxu0 0
        %1132 = vmatprep.subr.bf16.mxu0 0
        %1133 = vmatpush1.bf16.msra.mxu0 0
        %1134 = vmatprep.subr.bf16.mxu0 0
        %1135 = vmatpush1.bf16.msra.mxu0 0
        %1136 = vmatprep.subr.bf16.mxu0 0
        %1137 = vmatpush1.bf16.msra.mxu0 0
        %1138 = vmatprep.subr.bf16.mxu0 0
        %1139 = vmatpush1.bf16.msra.mxu0 0
        %1140 = vmatprep.subr.bf16.mxu0 0
        %1141 = vmatpush1.bf16.msra.mxu0 0
        %1142 = vmatprep.subr.bf16.mxu0 0
        %1143 = vmatpush1.bf16.msra.mxu0 0
        %1144 = vmatprep.mubr.bf16.mxu0 0
        %1145 = vmatmul.mubr.bf16.gmra.mrb[0].mxu0 %v1107
        %v1146 = vpop.f32.mrb[0].mxu0
        %v1147 = vadd.f32 %v1101, %v1146
        %v1148 = vpop.f32.mrb[0].mxu0
        %v1149 = vpop.f32.mrb[0].mxu0
        %v1150 = vpop.f32.mrb[0].mxu0
        %1151 = vdwg.mxu0
        %v1152 = vsel %vm764, %v1147, -inf
        %1153 = vmax.xlane.f32.xlu0 %v1152
        %v1154 = vpop.xlane.xlu0 %1153
        %v1155 = vsub.f32 %v1147, %v1154
        %v1156 = vmul.f32 %v1155, 1.442695
        %v1157 = vpow.pop %v1156
        %v1158 = vsel %vm764, %v1157, 0.0
        %1159 = vadd.xlane.f32.xlu0 %v1158
        %v1160 = vpop.xlane.xlu0 %1159
        %v1161 = vpack.c.bf16 %v1157, %v1157
        %1162 = vrot.lane.b32.xlu0 %v761, 104
        %v1163 = vpop.permute.xlu0 %1162
        %v1165 = vsel %vm764, %v1161, 0
        %v1168 = vsel %vm768, %v1163, 0
        %1170 = vmatprep.subr.bf16.mxu0 0
        %1171 = vmatpush1.bf16.msra.mxu0 %v1168
        %1172 = vmatprep.subr.bf16.mxu0 0
        %1173 = vmatpush1.bf16.msra.mxu0 0
        %1174 = vmatprep.subr.bf16.mxu0 0
        %1175 = vmatpush1.bf16.msra.mxu0 0
        %1176 = vmatprep.subr.bf16.mxu0 0
        %1177 = vmatpush1.bf16.msra.mxu0 0
        %1178 = vmatprep.subr.bf16.mxu0 0
        %1179 = vmatpush1.bf16.msra.mxu0 0
        %1180 = vmatprep.subr.bf16.mxu0 0
        %1181 = vmatpush1.bf16.msra.mxu0 0
        %1182 = vmatprep.subr.bf16.mxu0 0
        %1183 = vmatpush1.bf16.msra.mxu0 0
        %1184 = vmatprep.subr.bf16.mxu0 0
        %1185 = vmatpush1.bf16.msra.mxu0 0
        %1186 = vmatprep.subr.bf16.mxu0 0
        %1187 = vmatpush1.bf16.msra.mxu0 0
        %1188 = vmatprep.subr.bf16.mxu0 0
        %1189 = vmatpush1.bf16.msra.mxu0 0
        %1190 = vmatprep.subr.bf16.mxu0 0
        %1191 = vmatpush1.bf16.msra.mxu0 0
        %1192 = vmatprep.subr.bf16.mxu0 0
        %1193 = vmatpush1.bf16.msra.mxu0 0
        %1194 = vmatprep.subr.bf16.mxu0 0
        %1195 = vmatpush1.bf16.msra.mxu0 0
        %1196 = vmatprep.subr.bf16.mxu0 0
        %1197 = vmatpush1.bf16.msra.mxu0 0
        %1198 = vmatprep.subr.bf16.mxu0 0
        %1199 = vmatpush1.bf16.msra.mxu0 0
        %1200 = vmatprep.subr.bf16.mxu0 0
        %1201 = vmatpush1.bf16.msra.mxu0 0
        %1202 = vmatprep.mubr.bf16.mxu0 0
        %1203 = vmatmul.mubr.bf16.gmra.mrb[0].mxu0 %v1165
        %v1204 = vpop.f32.mrb[0].mxu0
        %v1205 = vadd.f32 0.0, %v1204
        %v1206 = vpop.f32.mrb[0].mxu0
        %v1207 = vpop.f32.mrb[0].mxu0
        %v1208 = vpop.f32.mrb[0].mxu0
        %1209 = vdwg.mxu0
        %v1210 = vrcp.pop %v1160
        %v1211 = vmul.f32 %v1205, %v1210
        %v1212 = vpack.c.bf16 %v1211, %v1211
        %1214 = vrot.lane.b32.xlu0 %v986, 8
        %v1215 = vpop.permute.xlu0 %1214
        %1217 = vrot.lane.b32.xlu0 %v1098, 16
        %v1218 = vpop.permute.xlu0 %1217
        %1220 = vrot.lane.b32.xlu0 %v1212, 24
        %v1221 = vpop.permute.xlu0 %1220
        %v1224 = vsel %vm764, %v870, %v1215
        %vm1225 = vcmask 130048
        %v1227 = vsel %vm1225, %v1224, %v1218
        %vm1228 = vcmask 195584
        %v1230 = vsel %vm1228, %v1227, %v1221
        %v1231 = vld [vmem:[#allocation13] sm:$0xf]
        %v1232 = vld [vmem:[#allocation13 + $0x4] sm:$0xf]
        %v1233 = vld [vmem:[#allocation13 + $0x8] sm:$0xf]
        %v1234 = vld [vmem:[#allocation13 + $0xc] sm:$0xf]
        %v1239 = vunpack.c.l.b16 %v1231
        %v1240 = vunpack.c.l.b16 %v1232
        %v1241 = vunpack.c.l.b16 %v1233
        %v1242 = vunpack.c.l.b16 %v1234
        %v1243 = vpack.c.b16 %v1240, %v1239
        %v1244 = vpack.c.b16 %v1242, %v1241
        %v1247 = vsel %vm581, %v1230, 0
        %1249 = vmatprep.subr.bf16.mxu0 0
        %1250 = vmatpush1.bf16.msra.mxu0 %v1243
        %1251 = vmatprep.subr.bf16.mxu0 0
        %1252 = vmatpush1.bf16.msra.mxu0 %v1244
        %1253 = vmatprep.subr.bf16.mxu0 0
        %1254 = vmatpush1.bf16.msra.mxu0 0
        %1255 = vmatprep.subr.bf16.mxu0 0
        %1256 = vmatpush1.bf16.msra.mxu0 0
        %1257 = vmatprep.subr.bf16.mxu0 0
        %1258 = vmatpush1.bf16.msra.mxu0 0
        %1259 = vmatprep.subr.bf16.mxu0 0
        %1260 = vmatpush1.bf16.msra.mxu0 0
        %1261 = vmatprep.subr.bf16.mxu0 0
        %1262 = vmatpush1.bf16.msra.mxu0 0
        %1263 = vmatprep.subr.bf16.mxu0 0
        %1264 = vmatpush1.bf16.msra.mxu0 0
        %1265 = vmatprep.subr.bf16.mxu0 0
        %1266 = vmatpush1.bf16.msra.mxu0 0
        %1267 = vmatprep.subr.bf16.mxu0 0
        %1268 = vmatpush1.bf16.msra.mxu0 0
        %1269 = vmatprep.subr.bf16.mxu0 0
        %1270 = vmatpush1.bf16.msra.mxu0 0
        %1271 = vmatprep.subr.bf16.mxu0 0
        %1272 = vmatpush1.bf16.msra.mxu0 0
        %1273 = vmatprep.subr.bf16.mxu0 0
        %1274 = vmatpush1.bf16.msra.mxu0 0
        %1275 = vmatprep.subr.bf16.mxu0 0
        %1276 = vmatpush1.bf16.msra.mxu0 0
        %1277 = vmatprep.subr.bf16.mxu0 0
        %1278 = vmatpush1.bf16.msra.mxu0 0
        %1279 = vmatprep.subr.bf16.mxu0 0
        %1280 = vmatpush1.bf16.msra.mxu0 0
        %1281 = vmatprep.mubr.bf16.mxu0 0
        %1282 = vmatmul.mubr.bf16.gmra.mrb[0].mxu0 %v1247
        %v1283 = vpop.f32.mrb[0].mxu0
        %v1284 = vadd.f32 0.0, %v1283
        %v1285 = vpop.f32.mrb[0].mxu0
        %v1286 = vpop.f32.mrb[0].mxu0
        %v1287 = vpop.f32.mrb[0].mxu0
        %1288 = vdwg.mxu0
        %p1289 = scmp.eq.s32.totalorder %s38, 0
        // Predicated region
        $region85: #{tpu_custom_call.1} parent=55 // pred_check
          %p1290 = pneg %p1289
        $region86: #{tpu_custom_call.1} parent=55 // pred_check_branch
          %1292 = sbr.rel (%p1290) target = $region88
        $region87: #{tpu_custom_call.1} parent=55 // pred_region
          %v1293 = vld [vmem:[%s8] sm:$0x1]
          %v1295 = vlaneseq
          %v1296 = vshrl.u32 %v1295, 7
          %v1297 = vsub.s32 0, %v1296
          %v1298 = vrot.slane %v1293, %v1297
          %v1300 = vadd.f32 %v1284, %v1298
          %1301 = vst.msk [vmem:[%s556] sm:$0xff] %vm581, %v1300
        $region88: #{tpu_custom_call.1} parent=55 // pred_fallthru
          _
        %p1302 = scmp.gt.s32.totalorder %s38, 0
        // Predicated region
        $region89: #{tpu_custom_call.1} parent=55 // pred_check
          %p1303 = pneg %p1302
        $region90: #{tpu_custom_call.1} parent=55 // pred_check_branch
          %1305 = sbr.rel (%p1303) target = $region92
        $region91: #{tpu_custom_call.1} parent=55 // pred_region
          %v1306 = vld [vmem:[%s556] sm:$0xff]
          %v1307 = vadd.f32 %v1306, %v1284
          %1308 = vst.msk [vmem:[%s556] sm:$0xff] %vm581, %v1307
        $region92: #{tpu_custom_call.1} parent=55 // pred_fallthru
          _
        %s1309 = sand.u32 %s284, 1
        %s1310 = scalar_lea.sflag [#allocation4], %s1309
        %s1311 = sand.u32 %s284, 1
        %s1312 = smul.addr %s1311, 8
        %s1313 = scalar_lea.vmem [#allocation14], %s1312
        // Predicated region
        $region93: #{tpu_custom_call.1} parent=55 // pred_check
          %p1314 = pneg %p294
        $region94: #{tpu_custom_call.1} parent=55 // pred_check_branch
          %1316 = sbr.rel (%p1314) target = $region96
        $region95: #{tpu_custom_call.1} parent=55 // pred_region
          %s1318 = ssub.s32 128, 128
          %1319 = vsyncadd %s1310, %s1318
          %s1320 = smul.addr %s37, 128
          %s1321 = scalar_lea.hbm %s9, %s1320
          %s1323 = sshll.u32 %s1313, 4
          %s1324 = int_to_ptr.vmem [resolvable:$true] %s1323
          %1326 = dma.vmem_to_hbm [thread:$0]  %s1324, 128, %s1321, %s1310
        $region96: #{tpu_custom_call.1} parent=55 // pred_fallthru
          _
      $region56: #{tpu_custom_call.1} parent=5 // pred_fallthru
        _
      %p1327 = scmp.le.s32.totalorder 2, %s28
      // Predicated region
      $region97: #{tpu_custom_call.1} parent=5 // pred_check
        %p1328 = pneg %p1327
      $region98: #{tpu_custom_call.1} parent=5 // pred_check_branch
        %1330 = sbr.rel (%p1328) target = $region100
      $region99: #{tpu_custom_call.1} parent=5 // pred_region
        %s1331 = ssub.s32 %s28, 2
        // Predicated region
        $region101: #{tpu_custom_call.1} parent=99 // pred_check
          %p1332 = pneg %p300
        $region102: #{tpu_custom_call.1} parent=99 // pred_check_branch
          %1334 = sbr.rel (%p1332) target = $region104
        $region103: #{tpu_custom_call.1} parent=99 // pred_region
          %s1335 = sand.u32 %s285, 1
          %s1336 = scalar_lea.sflag [#allocation4], %s1335
          %s1337 = sand.u32 %s285, 1
          %s1338 = smul.addr %s1337, 8
          %s1339 = scalar_lea.vmem [#allocation14], %s1338
          %1340 = dma.done %s1336, 128
        $region104: #{tpu_custom_call.1} parent=99 // pred_fallthru
          _
      $region100: #{tpu_custom_call.1} parent=5 // pred_fallthru
        _
    $region6: #{tpu_custom_call.1} parent=1 // loop_footer
      %s32 = sadd.s32 1, %s28
    $region7: #{tpu_custom_call.1} parent=1 // loop_footer_branch
      %27 = sbr.rel target = $region3
    $region8: #{tpu_custom_call.1} parent=1 // loop_exit
      _
    %1341 = vsyncpa [#allocation3], 1
    %s1342 = scalar_lea.sflag [#allocation3], 1
    %1343 = vsyncpa %s1342, 1
    %1344 = vsyncpa [#allocation6], 1
    %s1345 = scalar_lea.sflag [#allocation6], 1
    %1346 = vsyncpa %s1345, 1
    %1347 = vsyncpa [#allocation9], 1
    %s1348 = scalar_lea.sflag [#allocation9], 1
    %1349 = vsyncpa %s1348, 1
    %1350 = vsyncpa [#allocation12], 1
    %1351 = vsyncpa [#allocation4], 1
    %s1352 = scalar_lea.sflag [#allocation4], 1
    %1353 = vsyncpa %s1352, 1

</llo_original>
